<compile_context>
chip_gen: v7x
topology: tpu7x:2x2x1
jax: 0.10.0
libtpu: 0.0.40
codegen_flags: <defaults>
</compile_context>

<pallas_src>
import math

import jax
import jax.numpy as jnp
from jax.experimental import pallas as pl
from jax.experimental.pallas import tpu as pltpu


# ----------------------------------------------------------------------------
# helpers
# ----------------------------------------------------------------------------
def _matmul_tb(x, w):
    """x: (M, K) @ w: (N, K) [PyTorch (out, in) layout] -> (M, N), f32 accumulate."""
    return jax.lax.dot_general(
        x, w,
        dimension_numbers=(((1,), (1,)), ((), ())),
        preferred_element_type=jnp.float32,
    )


def _gelu_tanh(x):
    c = 0.7978845608028654  # sqrt(2/pi)
    return 0.5 * x * (1.0 + jnp.tanh(c * (x + 0.044715 * x * x * x)))


def _layernorm(y, gamma, beta, eps):
    mu = jnp.mean(y, axis=-1, keepdims=True)
    d = y - mu
    var = jnp.mean(d * d, axis=-1, keepdims=True)
    return d * jax.lax.rsqrt(var + eps) * gamma + beta


def _vmem_capacity_bytes():
    try:
        return int(pltpu.get_tpu_info().vmem_capacity_bytes)
    except Exception:
        return 64 << 20            # conservative (v7x-sized) fallback


def _compiler_params(dims):
    cap = _vmem_capacity_bytes()
    return pltpu.CompilerParams(
        dimension_semantics=dims,
        vmem_limit_bytes=int(min(cap * 3 // 4, 96 << 20)),
    )


def _pick_row_tile(rows):
    """Generation-dependent dense row tile (larger on 128-MiB-VMEM chips)."""
    target = 512 if _vmem_capacity_bytes() >= (100 << 20) else 256
    return rows if rows <= target else target     # pl.cdiv grid handles the tail


def _pick_q_tile(seq):
    if seq <= 256:
        return seq
    for t in (256, 128, 64, 32, 16, 8):
        if seq % t == 0:
            return t
    return seq   # TODO(synk): awkward seq lengths fall back to one (S, S) score tile


# ----------------------------------------------------------------------------
# kernel 1: QKV + attention + output projection + residual + LayerNorm
# ----------------------------------------------------------------------------
def _make_attn_block_kernel(num_heads, d_head, q_tile, eps):
    scale = 1.0 / math.sqrt(d_head)

    def kernel(x_ref, wq_ref, bq_ref, wk_ref, bk_ref, wv_ref, bv_ref,
               wo_ref, bo_ref, g_ref, beta_ref, o_ref, acc_ref):
        head = pl.program_id(1)

        @pl.when(head == 0)
        def _init():
            acc_ref[...] = jnp.zeros_like(acc_ref)

        w_dtype = wq_ref.dtype
        x_w = x_ref[...].astype(w_dtype)                       # matmul-operand dtype

        # Per-head K / V projection for the whole sequence.  Each head uses a
        # distinct weight slice, so no work is repeated across the head axis.
        k = _matmul_tb(x_w, wk_ref[...]) + bk_ref[0]           # (S, dh) f32
        v = _matmul_tb(x_w, wv_ref[...]) + bv_ref[0]           # (S, dh) f32
        k = k.astype(w_dtype)
        v = v.astype(w_dtype)

        n_q = x_ref.shape[0] // q_tile                         # static trip count

        @pl.loop(0, n_q)
        def _q_step(qi):
            lo = pl.multiple_of(qi * q_tile, q_tile)
            xq = x_ref[pl.ds(lo, q_tile), :].astype(w_dtype)   # (tq, H)
            q = _matmul_tb(xq, wq_ref[...]) + bq_ref[0]        # (tq, dh) f32
            q = (q * scale).astype(w_dtype)
            s = jax.lax.dot_general(                           # (tq, S) f32
                q, k, dimension_numbers=(((1,), (1,)), ((), ())),
                preferred_element_type=jnp.float32)
            m = jnp.max(s, axis=-1, keepdims=True)
            e = jnp.exp(s - m)                                 # EUP
            p = e * pl.reciprocal(jnp.sum(e, axis=-1, keepdims=True), approx=True)
            ctx = jnp.dot(p.astype(w_dtype), v,                # (tq, dh) f32
                          preferred_element_type=jnp.float32)
            # accumulate this head's slice of the output projection
            contrib = jnp.dot(ctx.astype(w_dtype), wo_ref[...],
                              preferred_element_type=jnp.float32)   # (tq, H) f32
            acc_ref[pl.ds(lo, q_tile), :] = acc_ref[pl.ds(lo, q_tile), :] + contrib

        @pl.when(head == num_heads - 1)
        def _finalize():
            y = acc_ref[...] + bo_ref[...] + x_ref[...].astype(jnp.float32)
            o_ref[...] = _layernorm(y, g_ref[...], beta_ref[...], eps).astype(o_ref.dtype)

    return kernel


def _attention_block(x2d, batch, seq, wq, bq, wk, bk, wv, bv, wo_t, bo,
                     gamma, beta, *, num_heads, eps):
    rows, hidden = x2d.shape
    d_head = hidden // num_heads
    q_tile = _pick_q_tile(seq)
    w_bytes = wq.dtype.itemsize

    x_spec = pl.BlockSpec((seq, hidden), lambda bi, hi: (bi, 0))
    wh_spec = pl.BlockSpec((d_head, hidden), lambda bi, hi: (hi, 0))
    bh_spec = pl.BlockSpec((1, 1, d_head), lambda bi, hi: (hi, 0, 0))
    cn_spec = pl.BlockSpec((1, hidden), lambda bi, hi: (0, 0))

    cost = pl.CostEstimate(
        flops=int(batch * (8 * seq * hidden * hidden + 4 * seq * seq * hidden)),
        transcendentals=int(batch * num_heads * seq * seq),
        bytes_accessed=int(2 * rows * hidden * x2d.dtype.itemsize
                           + 4 * hidden * hidden * w_bytes + 32 * hidden),
    )
    return pl.pallas_call(
        _make_attn_block_kernel(num_heads, d_head, q_tile, eps),
        grid=(batch, num_heads),
        in_specs=[x_spec,
                  wh_spec, bh_spec,       # Q
                  wh_spec, bh_spec,       # K
                  wh_spec, bh_spec,       # V
                  wh_spec,                # output projection (pre-transposed, row block)
                  cn_spec, cn_spec, cn_spec],
        out_specs=pl.BlockSpec((seq, hidden), lambda bi, hi: (bi, 0)),
        out_shape=jax.ShapeDtypeStruct((rows, hidden), x2d.dtype),
        scratch_shapes=[pltpu.VMEM((seq, hidden), jnp.float32)],
        compiler_params=_compiler_params(("parallel", "arbitrary")),
        cost_estimate=cost,
    )(x2d, wq, bq, wk, bk, wv, bv, wo_t, bo, gamma, beta)


# ----------------------------------------------------------------------------
# kernel 2: Dense + GELU + Dense + residual + LayerNorm (full FFN)
# ----------------------------------------------------------------------------
def _make_ffn_kernel(eps):
    def kernel(x_ref, wi_ref, bi_ref, wo_ref, bo_ref, g_ref, beta_ref, o_ref):
        x = x_ref[...]
        w_dtype = wi_ref.dtype
        h1 = _gelu_tanh(_matmul_tb(x.astype(w_dtype), wi_ref[...]) + bi_ref[...])  # (tm, 4H) f32
        y = _matmul_tb(h1.astype(w_dtype), wo_ref[...]) + bo_ref[...]              # (tm, H) f32
        y = y + x.astype(jnp.float32)
        o_ref[...] = _layernorm(y, g_ref[...], beta_ref[...], eps).astype(o_ref.dtype)

    return kernel


def _ffn_block(x2d, wi, bi, wo, bo, gamma, beta, *, eps):
    rows, hidden = x2d.shape
    inter = wi.shape[0]
    tm = _pick_row_tile(rows)
    w_bytes = wi.dtype.itemsize

    row_spec = pl.BlockSpec((tm, hidden), lambda i: (i, 0))
    cost = pl.CostEstimate(
        flops=int(4 * rows * hidden * inter),
        transcendentals=int(rows * inter),
        bytes_accessed=int(2 * rows * hidden * x2d.dtype.itemsize
                           + 2 * hidden * inter * w_bytes + 4 * (inter + 3 * hidden)),
    )
    return pl.pallas_call(
        _make_ffn_kernel(eps),
        grid=(pl.cdiv(rows, tm),),
        in_specs=[
            row_spec,
            pl.BlockSpec((inter, hidden), lambda i: (0, 0)),
            pl.BlockSpec((1, inter), lambda i: (0, 0)),
            pl.BlockSpec((hidden, inter), lambda i: (0, 0)),
            pl.BlockSpec((1, hidden), lambda i: (0, 0)),
            pl.BlockSpec((1, hidden), lambda i: (0, 0)),
            pl.BlockSpec((1, hidden), lambda i: (0, 0)),
        ],
        out_specs=row_spec,
        out_shape=jax.ShapeDtypeStruct((rows, hidden), x2d.dtype),
        compiler_params=_compiler_params(("parallel",)),
        cost_estimate=cost,
    )(x2d, wi, bi, wo, bo, gamma, beta)


# ----------------------------------------------------------------------------
# full transformer block
# ----------------------------------------------------------------------------
def bert_transformer_block(hidden_states, params, *, num_heads, eps=1e-12,
                           weight_dtype=None):
    """hidden_states: (B, S, H); all Linear weights in PyTorch (out, in) layout.

    weight_dtype: optional dtype (e.g. jnp.bfloat16) for all Linear weights —
    halves weight DMA / VMEM and uses the bf16 MXU rate; accumulation stays f32.
    """
    b, s, hidden = hidden_states.shape
    assert hidden % num_heads == 0
    d_head = hidden // num_heads
    # TODO(synk): sequence lengths not a multiple of 8 would need padding for the
    #             (S, H) attention block; typical BERT sequence lengths are fine.
    rows = b * s
    x2d = hidden_states.reshape(rows, hidden)          # free reshape (contiguous)

    def w_cast(w):
        return w if weight_dtype is None else w.astype(weight_dtype)

    def b_row(v):                                      # lane-dense (1, D) f32 param
        return v.reshape(1, -1).astype(jnp.float32)

    def b_head(v):                                     # per-head (nh, 1, dh) f32 bias
        return v.reshape(num_heads, 1, d_head).astype(jnp.float32)

    # Attention output projection pre-transposed to (in, out) once so each head's
    # (d_head, H) slice is a contiguous row block (clean MXU operand).
    wo_t = jnp.transpose(w_cast(params["w_attn_out"]))

    # 1) fused QKV + attention + output dense + residual + LayerNorm
    attn_out = _attention_block(
        x2d, b, s,
        w_cast(params["wq"]), b_head(params["bq"]),
        w_cast(params["wk"]), b_head(params["bk"]),
        w_cast(params["wv"]), b_head(params["bv"]),
        wo_t, b_row(params["b_attn_out"]),
        b_row(params["ln1_g"]), b_row(params["ln1_b"]),
        num_heads=num_heads, eps=eps)

    # 2) fused Dense + GELU + Dense + residual + LayerNorm
    out2d = _ffn_block(
        attn_out,
        w_cast(params["w_inter"]), b_row(params["b_inter"]),
        w_cast(params["w_out"]), b_row(params["b_out"]),
        b_row(params["ln2_g"]), b_row(params["ln2_b"]),
        eps=eps)

    return out2d.reshape(b, s, hidden)


# ----------------------------------------------------------------------------
# pure-JAX reference (same math as the PyTorch forward in eval mode)
# ----------------------------------------------------------------------------
def _ref_transformer_block(x, p, num_heads, eps):
    b, s, hidden = x.shape
    dh = hidden // num_heads

    def lin(t, w, bias):
        return jnp.einsum("bsh,oh->bso", t, w) + bias

    def ln(t, g, bb):
        mu = jnp.mean(t, axis=-1, keepdims=True)
        var = jnp.mean((t - mu) ** 2, axis=-1, keepdims=True)
        return (t - mu) * jax.lax.rsqrt(var + eps) * g + bb

    q = lin(x, p["wq"], p["bq"]).reshape(b, s, num_heads, dh).transpose(0, 2, 1, 3)
    k = lin(x, p["wk"], p["bk"]).reshape(b, s, num_heads, dh).transpose(0, 2, 1, 3)
    v = lin(x, p["wv"], p["bv"]).reshape(b, s, num_heads, dh).transpose(0, 2, 1, 3)
    scores = jnp.einsum("bhqd,bhkd->bhqk", q, k) / math.sqrt(dh)
    attn = jax.nn.softmax(scores, axis=-1)
    ctx = jnp.einsum("bhqk,bhkd->bhqd", attn, v).transpose(0, 2, 1, 3).reshape(b, s, hidden)

    attn_out = ln(lin(ctx, p["w_attn_out"], p["b_attn_out"]) + x, p["ln1_g"], p["ln1_b"])
    inter = _gelu_tanh(lin(attn_out, p["w_inter"], p["b_inter"]))
    return ln(lin(inter, p["w_out"], p["b_out"]) + attn_out, p["ln2_g"], p["ln2_b"])


# ----------------------------------------------------------------------------
# demo / self-check
# ----------------------------------------------------------------------------
if __name__ == "__main__":
    B, S, H = 2, 16, 64
    NUM_HEADS = 4          # d_head = 16
    INTER = 4 * H
    EPS = 1e-12

    key = jax.random.PRNGKey(0)
    ks = jax.random.split(key, 17)

    def lin_params(kw, kb, dout, din):
        w = jax.random.normal(kw, (dout, din), dtype=jnp.float32) * 0.05
        bias = jax.random.normal(kb, (dout,), dtype=jnp.float32) * 0.05
        return w, bias

    wq, bq = lin_params(ks[0], ks[1], H, H)
    wk, bk = lin_params(ks[2], ks[3], H, H)
    wv, bv = lin_params(ks[4], ks[5], H, H)
    w_ao, b_ao = lin_params(ks[6], ks[7], H, H)
    w_i, b_i = lin_params(ks[8], ks[9], INTER, H)
    w_o, b_o = lin_params(ks[10], ks[11], H, INTER)

    params = {
        "wq": wq, "bq": bq, "wk": wk, "bk": bk, "wv": wv, "bv": bv,
        "w_attn_out": w_ao, "b_attn_out": b_ao,
        "ln1_g": 1.0 + 0.1 * jax.random.normal(ks[12], (H,), dtype=jnp.float32),
        "ln1_b": 0.1 * jax.random.normal(ks[13], (H,), dtype=jnp.float32),
        "w_inter": w_i, "b_inter": b_i,
        "w_out": w_o, "b_out": b_o,
        "ln2_g": 1.0 + 0.1 * jax.random.normal(ks[14], (H,), dtype=jnp.float32),
        "ln2_b": 0.1 * jax.random.normal(ks[15], (H,), dtype=jnp.float32),
    }

    hidden_states = jax.random.normal(ks[16], (B, S, H), dtype=jnp.float32)

    ref = _ref_transformer_block(hidden_states, params, NUM_HEADS, EPS)

    # --- f32 weights: correctness check against the pure-JAX reference. ---
    out = bert_transformer_block(hidden_states, params, num_heads=NUM_HEADS, eps=EPS)
    out = jax.block_until_ready(out)
    assert out.shape == (B, S, H)
    # Tolerance covers TPU default-precision MXU matmuls (both paths) and the
    # EUP approximate reciprocal in the softmax denominator.
    assert jnp.allclose(out, ref, atol=2e-2, rtol=2e-2), \
        float(jnp.max(jnp.abs(out - ref)))

    # --- bf16 weights (performance path): same math, loose tolerance. ---
    out_bf16 = bert_transformer_block(hidden_states, params, num_heads=NUM_HEADS,
                                      eps=EPS, weight_dtype=jnp.bfloat16)
    out_bf16 = jax.block_until_ready(out_bf16)
    assert out_bf16.shape == (B, S, H)
    assert bool(jnp.all(jnp.isfinite(out_bf16)))
    assert jnp.allclose(out_bf16, ref, atol=6e-2, rtol=6e-2), \
        float(jnp.max(jnp.abs(out_bf16 - ref)))

    print("KERNEL_OK")
</pallas_src>

<mosaic_0001>
module attributes {stable_mosaic.version = 11 : i64} {
  func.func @kernel(%arg0: i32, %arg1: i32, %arg2: memref<16x64xf32, #tpu.memory_space<vmem>>, %arg3: memref<16x64xf32, #tpu.memory_space<vmem>>, %arg4: memref<1x1x16xf32, #tpu.memory_space<vmem>>, %arg5: memref<16x64xf32, #tpu.memory_space<vmem>>, %arg6: memref<1x1x16xf32, #tpu.memory_space<vmem>>, %arg7: memref<16x64xf32, #tpu.memory_space<vmem>>, %arg8: memref<1x1x16xf32, #tpu.memory_space<vmem>>, %arg9: memref<16x64xf32, #tpu.memory_space<vmem>>, %arg10: memref<1x64xf32, #tpu.memory_space<vmem>>, %arg11: memref<1x64xf32, #tpu.memory_space<vmem>>, %arg12: memref<1x64xf32, #tpu.memory_space<vmem>>, %arg13: memref<16x64xf32, #tpu.memory_space<vmem>>, %arg14: memref<16x64xf32, #tpu.memory_space<vmem>>) attributes {dimension_semantics = [#tpu.dimension_semantics<parallel>, #tpu.dimension_semantics<arbitrary>], iteration_bounds = array<i64: 2, 4>, scalar_prefetch = 0 : i64, scratch_operands = 1 : i64, tpu.core_type = #tpu.core_type<tc>, window_params = [{transform_indices = @transform_0, window_bounds = array<i64: 16, 64>}, {transform_indices = @transform_1, window_bounds = array<i64: 16, 64>}, {transform_indices = @transform_2, window_bounds = array<i64: 1, 1, 16>}, {transform_indices = @transform_3, window_bounds = array<i64: 16, 64>}, {transform_indices = @transform_4, window_bounds = array<i64: 1, 1, 16>}, {transform_indices = @transform_5, window_bounds = array<i64: 16, 64>}, {transform_indices = @transform_6, window_bounds = array<i64: 1, 1, 16>}, {transform_indices = @transform_7, window_bounds = array<i64: 16, 64>}, {pipeline_mode = #tpu.pipeline_mode<synchronous>, transform_indices = @transform_8, window_bounds = array<i64: 1, 64>}, {pipeline_mode = #tpu.pipeline_mode<synchronous>, transform_indices = @transform_9, window_bounds = array<i64: 1, 64>}, {pipeline_mode = #tpu.pipeline_mode<synchronous>, transform_indices = @transform_10, window_bounds = array<i64: 1, 64>}, {transform_indices = @transform_11, window_bounds = array<i64: 16, 64>}]} {
    %c0_i32 = arith.constant 0 : i32
    %0 = arith.cmpi eq, %arg1, %c0_i32 : i32
    %1 = arith.extui %0 : i1 to i32
    %c0_i32_0 = arith.constant 0 : i32
    %2 = arith.cmpi ne, %1, %c0_i32_0 : i32
    scf.if %2 {
      %cst_34 = arith.constant 0.000000e+00 : f32
      %52 = vector.broadcast %cst_34 : f32 to vector<16x64xf32>
      %c0_35 = arith.constant 0 : index
      %c0_36 = arith.constant 0 : index
      %53 = vector.load %arg14[%c0_35, %c0_36] : memref<16x64xf32, #tpu.memory_space<vmem>>, vector<16x64xf32>
      tpu.vector_store %arg14[%c0_35, %c0_36], %52 {strides = array<i32>} : memref<16x64xf32, #tpu.memory_space<vmem>>, vector<16x64xf32>,
    } else {
    }
    %c0 = arith.constant 0 : index
    %c0_1 = arith.constant 0 : index
    %3 = vector.load %arg2[%c0, %c0_1] : memref<16x64xf32, #tpu.memory_space<vmem>>, vector<16x64xf32>
    %c0_2 = arith.constant 0 : index
    %c0_3 = arith.constant 0 : index
    %4 = vector.load %arg5[%c0_2, %c0_3] : memref<16x64xf32, #tpu.memory_space<vmem>>, vector<16x64xf32>
    %cst = arith.constant dense<0.000000e+00> : vector<16x16xf32>
    %5 = tpu.matmul %3, %4, %cst {dimension_numbers = #tpu.dot_dimension_numbers<[1], [1], [0], [0], [0, 0, 1, 0], [], []>} : vector<16x64xf32>, vector<16x64xf32>, vector<16x16xf32> -> vector<16x16xf32>
    %c0_4 = arith.constant 0 : index
    %c0_5 = arith.constant 0 : index
    %c0_6 = arith.constant 0 : index
    %6 = vector.load %arg6[%c0_4, %c0_5, %c0_6] : memref<1x1x16xf32, #tpu.memory_space<vmem>>, vector<1x1x16xf32>
    %7 = vector.shape_cast %6 : vector<1x1x16xf32> to vector<1x16xf32>
    %8 = vector.broadcast %7 : vector<1x16xf32> to vector<16x16xf32>
    %9 = arith.addf %5, %8 : vector<16x16xf32>
    %c0_7 = arith.constant 0 : index
    %c0_8 = arith.constant 0 : index
    %10 = vector.load %arg7[%c0_7, %c0_8] : memref<16x64xf32, #tpu.memory_space<vmem>>, vector<16x64xf32>
    %cst_9 = arith.constant dense<0.000000e+00> : vector<16x16xf32>
    %11 = tpu.matmul %3, %10, %cst_9 {dimension_numbers = #tpu.dot_dimension_numbers<[1], [1], [0], [0], [0, 0, 1, 0], [], []>} : vector<16x64xf32>, vector<16x64xf32>, vector<16x16xf32> -> vector<16x16xf32>
    %c0_10 = arith.constant 0 : index
    %c0_11 = arith.constant 0 : index
    %c0_12 = arith.constant 0 : index
    %12 = vector.load %arg8[%c0_10, %c0_11, %c0_12] : memref<1x1x16xf32, #tpu.memory_space<vmem>>, vector<1x1x16xf32>
    %13 = vector.shape_cast %12 : vector<1x1x16xf32> to vector<1x16xf32>
    %14 = vector.broadcast %13 : vector<1x16xf32> to vector<16x16xf32>
    %15 = arith.addf %11, %14 : vector<16x16xf32>
    %c0_i32_13 = arith.constant 0 : i32
    %c1_i32 = arith.constant 1 : i32
    %16 = arith.muli %c0_i32_13, %c1_i32 : i32
    %c0_i32_14 = arith.constant 0 : i32
    %17 = arith.addi %c0_i32_14, %16 : i32
    %c16_i32 = arith.constant 16 : i32
    %18 = arith.muli %17, %c16_i32 : i32
    %19 = tpu.assume_multiple %18, 16 : i32
    %20 = arith.index_cast %19 : i32 to index
    %c0_15 = arith.constant 0 : index
    %21 = vector.load %arg2[%20, %c0_15] : memref<16x64xf32, #tpu.memory_space<vmem>>, vector<16x64xf32>
    %c0_16 = arith.constant 0 : index
    %c0_17 = arith.constant 0 : index
    %22 = vector.load %arg3[%c0_16, %c0_17] : memref<16x64xf32, #tpu.memory_space<vmem>>, vector<16x64xf32>
    %cst_18 = arith.constant dense<0.000000e+00> : vector<16x16xf32>
    %23 = tpu.matmul %21, %22, %cst_18 {dimension_numbers = #tpu.dot_dimension_numbers<[1], [1], [0], [0], [0, 0, 1, 0], [], []>} : vector<16x64xf32>, vector<16x64xf32>, vector<16x16xf32> -> vector<16x16xf32>
    %c0_19 = arith.constant 0 : index
    %c0_20 = arith.constant 0 : index
    %c0_21 = arith.constant 0 : index
    %24 = vector.load %arg4[%c0_19, %c0_20, %c0_21] : memref<1x1x16xf32, #tpu.memory_space<vmem>>, vector<1x1x16xf32>
    %25 = vector.shape_cast %24 : vector<1x1x16xf32> to vector<1x16xf32>
    %26 = vector.broadcast %25 : vector<1x16xf32> to vector<16x16xf32>
    %27 = arith.addf %23, %26 : vector<16x16xf32>
    %cst_22 = arith.constant 2.500000e-01 : f32
    %28 = vector.broadcast %cst_22 : f32 to vector<16x16xf32>
    %29 = arith.mulf %27, %28 : vector<16x16xf32>
    %cst_23 = arith.constant dense<0.000000e+00> : vector<16x16xf32>
    %30 = tpu.matmul %29, %9, %cst_23 {dimension_numbers = #tpu.dot_dimension_numbers<[1], [1], [0], [0], [0, 0, 1, 0], [], []>} : vector<16x16xf32>, vector<16x16xf32>, vector<16x16xf32> -> vector<16x16xf32>
    %cst_24 = arith.constant dense<0xFF800000> : vector<16xf32>
    %31 = vector.multi_reduction <maximumf>, %30, %cst_24 [1] : vector<16x16xf32> to vector<16xf32>
    %32 = vector.shape_cast %31 : vector<16xf32> to vector<16x1xf32>
    %33 = vector.broadcast %32 : vector<16x1xf32> to vector<16x16xf32>
    %34 = arith.subf %30, %33 : vector<16x16xf32>
    %35 = math.exp %34 : vector<16x16xf32>
    %cst_25 = arith.constant dense<0.000000e+00> : vector<16xf32>
    %36 = vector.multi_reduction <add>, %35, %cst_25 [1] : vector<16x16xf32> to vector<16xf32>
    %37 = vector.shape_cast %36 : vector<16xf32> to vector<16x1xf32>
    %38 = tpu.reciprocal %37 {approx = true} : vector<16x1xf32> -> vector<16x1xf32>
    %39 = vector.broadcast %38 : vector<16x1xf32> to vector<16x16xf32>
    %40 = arith.mulf %35, %39 : vector<16x16xf32>
    %cst_26 = arith.constant dense<0.000000e+00> : vector<16x16xf32>
    %41 = tpu.matmul %40, %15, %cst_26 {dimension_numbers = #tpu.dot_dimension_numbers<[1], [0], [0], [1], [0, 0, 1, 1], [], []>} : vector<16x16xf32>, vector<16x16xf32>, vector<16x16xf32> -> vector<16x16xf32>
    %c0_27 = arith.constant 0 : index
    %c0_28 = arith.constant 0 : index
    %42 = vector.load %arg9[%c0_27, %c0_28] : memref<16x64xf32, #tpu.memory_space<vmem>>, vector<16x64xf32>
    %cst_29 = arith.constant dense<0.000000e+00> : vector<16x64xf32>
    %43 = tpu.matmul %41, %42, %cst_29 {dimension_numbers = #tpu.dot_dimension_numbers<[1], [0], [0], [1], [0, 0, 1, 1], [], []>} : vector<16x16xf32>, vector<16x64xf32>, vector<16x64xf32> -> vector<16x64xf32>
    %44 = arith.index_cast %19 : i32 to index
    %c0_30 = arith.constant 0 : index
    %45 = vector.load %arg14[%44, %c0_30] : memref<16x64xf32, #tpu.memory_space<vmem>>, vector<16x64xf32>
    %46 = arith.addf %45, %43 : vector<16x64xf32>
    %47 = arith.index_cast %19 : i32 to index
    %c0_31 = arith.constant 0 : index
    %48 = vector.load %arg14[%47, %c0_31] : memref<16x64xf32, #tpu.memory_space<vmem>>, vector<16x64xf32>
    tpu.vector_store %arg14[%47, %c0_31], %46 {strides = array<i32>} : memref<16x64xf32, #tpu.memory_space<vmem>>, vector<16x64xf32>,
    %c1_i32_32 = arith.constant 1 : i32
    %c3_i32 = arith.constant 3 : i32
    %49 = arith.cmpi eq, %arg1, %c3_i32 : i32
    %50 = arith.extui %49 : i1 to i32
    %c0_i32_33 = arith.constant 0 : i32
    %51 = arith.cmpi ne, %50, %c0_i32_33 : i32
    scf.if %51 {
      %c0_34 = arith.constant 0 : index
      %c0_35 = arith.constant 0 : index
      %52 = vector.load %arg14[%c0_34, %c0_35] : memref<16x64xf32, #tpu.memory_space<vmem>>, vector<16x64xf32>
      %c0_36 = arith.constant 0 : index
      %c0_37 = arith.constant 0 : index
      %53 = vector.load %arg10[%c0_36, %c0_37] : memref<1x64xf32, #tpu.memory_space<vmem>>, vector<1x64xf32>
      %54 = vector.broadcast %53 : vector<1x64xf32> to vector<16x64xf32>
      %55 = arith.addf %52, %54 : vector<16x64xf32>
      %c0_38 = arith.constant 0 : index
      %c0_39 = arith.constant 0 : index
      %56 = vector.load %arg2[%c0_38, %c0_39] : memref<16x64xf32, #tpu.memory_space<vmem>>, vector<16x64xf32>
      %57 = arith.addf %55, %56 : vector<16x64xf32>
      %c0_40 = arith.constant 0 : index
      %c0_41 = arith.constant 0 : index
      %58 = vector.load %arg11[%c0_40, %c0_41] : memref<1x64xf32, #tpu.memory_space<vmem>>, vector<1x64xf32>
      %c0_42 = arith.constant 0 : index
      %c0_43 = arith.constant 0 : index
      %59 = vector.load %arg12[%c0_42, %c0_43] : memref<1x64xf32, #tpu.memory_space<vmem>>, vector<1x64xf32>
      %cst_44 = arith.constant dense<0.000000e+00> : vector<16xf32>
      %60 = vector.multi_reduction <add>, %57, %cst_44 [1] : vector<16x64xf32> to vector<16xf32>
      %61 = vector.shape_cast %60 : vector<16xf32> to vector<16x1xf32>
      %cst_45 = arith.constant 6.400000e+01 : f32
      %62 = vector.broadcast %cst_45 : f32 to vector<16x1xf32>
      %63 = arith.divf %61, %62 : vector<16x1xf32>
      %64 = vector.broadcast %63 : vector<16x1xf32> to vector<16x64xf32>
      %65 = arith.subf %57, %64 : vector<16x64xf32>
      %66 = arith.mulf %65, %65 : vector<16x64xf32>
      %cst_46 = arith.constant dense<0.000000e+00> : vector<16xf32>
      %67 = vector.multi_reduction <add>, %66, %cst_46 [1] : vector<16x64xf32> to vector<16xf32>
      %68 = vector.shape_cast %67 : vector<16xf32> to vector<16x1xf32>
      %cst_47 = arith.constant 6.400000e+01 : f32
      %69 = vector.broadcast %cst_47 : f32 to vector<16x1xf32>
      %70 = arith.divf %68, %69 : vector<16x1xf32>
      %cst_48 = arith.constant 9.99999996E-13 : f32
      %71 = vector.broadcast %cst_48 : f32 to vector<16x1xf32>
      %72 = arith.addf %70, %71 : vector<16x1xf32>
      %73 = math.rsqrt %72 : vector<16x1xf32>
      %74 = vector.broadcast %73 : vector<16x1xf32> to vector<16x64xf32>
      %75 = arith.mulf %65, %74 : vector<16x64xf32>
      %76 = vector.broadcast %58 : vector<1x64xf32> to vector<16x64xf32>
      %77 = arith.mulf %75, %76 : vector<16x64xf32>
      %78 = vector.broadcast %59 : vector<1x64xf32> to vector<16x64xf32>
      %79 = arith.addf %77, %78 : vector<16x64xf32>
      %c0_49 = arith.constant 0 : index
      %c0_50 = arith.constant 0 : index
      %80 = vector.load %arg13[%c0_49, %c0_50] : memref<16x64xf32, #tpu.memory_space<vmem>>, vector<16x64xf32>
      tpu.vector_store %arg13[%c0_49, %c0_50], %79 {strides = array<i32>} : memref<16x64xf32, #tpu.memory_space<vmem>>, vector<16x64xf32>,
    } else {
    }
    return
  }
  func.func @transform_0(%arg0: i32, %arg1: i32) -> (i32, i32) {
    %c0_i32 = arith.constant 0 : i32
    %c0_i32_0 = arith.constant 0 : i32
    return %arg0, %c0_i32 : i32, i32
  }
  func.func @transform_1(%arg0: i32, %arg1: i32) -> (i32, i32) {
    %c0_i32 = arith.constant 0 : i32
    %c0_i32_0 = arith.constant 0 : i32
    return %arg1, %c0_i32 : i32, i32
  }
  func.func @transform_2(%arg0: i32, %arg1: i32) -> (i32, i32, i32) {
    %c0_i32 = arith.constant 0 : i32
    %c0_i32_0 = arith.constant 0 : i32
    %c0_i32_1 = arith.constant 0 : i32
    return %arg1, %c0_i32, %c0_i32_0 : i32, i32, i32
  }
  func.func @transform_3(%arg0: i32, %arg1: i32) -> (i32, i32) {
    %c0_i32 = arith.constant 0 : i32
    %c0_i32_0 = arith.constant 0 : i32
    return %arg1, %c0_i32 : i32, i32
  }
  func.func @transform_4(%arg0: i32, %arg1: i32) -> (i32, i32, i32) {
    %c0_i32 = arith.constant 0 : i32
    %c0_i32_0 = arith.constant 0 : i32
    %c0_i32_1 = arith.constant 0 : i32
    return %arg1, %c0_i32, %c0_i32_0 : i32, i32, i32
  }
  func.func @transform_5(%arg0: i32, %arg1: i32) -> (i32, i32) {
    %c0_i32 = arith.constant 0 : i32
    %c0_i32_0 = arith.constant 0 : i32
    return %arg1, %c0_i32 : i32, i32
  }
  func.func @transform_6(%arg0: i32, %arg1: i32) -> (i32, i32, i32) {
    %c0_i32 = arith.constant 0 : i32
    %c0_i32_0 = arith.constant 0 : i32
    %c0_i32_1 = arith.constant 0 : i32
    return %arg1, %c0_i32, %c0_i32_0 : i32, i32, i32
  }
  func.func @transform_7(%arg0: i32, %arg1: i32) -> (i32, i32) {
    %c0_i32 = arith.constant 0 : i32
    %c0_i32_0 = arith.constant 0 : i32
    return %arg1, %c0_i32 : i32, i32
  }
  func.func @transform_8(%arg0: i32, %arg1: i32) -> (i32, i32) {
    %c0_i32 = arith.constant 0 : i32
    %c0_i32_0 = arith.constant 0 : i32
    %c0_i32_1 = arith.constant 0 : i32
    return %c0_i32, %c0_i32_0 : i32, i32
  }
  func.func @transform_9(%arg0: i32, %arg1: i32) -> (i32, i32) {
    %c0_i32 = arith.constant 0 : i32
    %c0_i32_0 = arith.constant 0 : i32
    %c0_i32_1 = arith.constant 0 : i32
    return %c0_i32, %c0_i32_0 : i32, i32
  }
  func.func @transform_10(%arg0: i32, %arg1: i32) -> (i32, i32) {
    %c0_i32 = arith.constant 0 : i32
    %c0_i32_0 = arith.constant 0 : i32
    %c0_i32_1 = arith.constant 0 : i32
    return %c0_i32, %c0_i32_0 : i32, i32
  }
  func.func @transform_11(%arg0: i32, %arg1: i32) -> (i32, i32) {
    %c0_i32 = arith.constant 0 : i32
    %c0_i32_0 = arith.constant 0 : i32
    return %arg0, %c0_i32 : i32, i32
  }
}

</mosaic_0001>

<llo_original>
// kernel: tpu_custom_call.1
$region0: #{tpu_custom_call.1}
  #allocation0 [shape = 'u32[]', space=smem, size = 0x4, offset = 0x4, fixed_abs, tag = 'smem constant byte address 0x4 - core index']
  #allocation1 [shape = 'u32[144,128]{1,0:T(1,128)}', space=vmem, size = 0x12000, scoped, tag = 'internal scratch']
  #allocation2 [shape = 'f32[16,64]{1,0:T(8,128)}', space=vmem, size = 0x2000, scoped, tag = 'scratch operand']
  %s0 = inlined_call_operand.hbm [shape: f32[32,64], index: 0, kind: input, shape index: {}]
  %s1 = inlined_call_operand.hbm [shape: f32[64,64], index: 1, kind: input, shape index: {}]
  %s2 = inlined_call_operand.vmem [shape: f32[4,1,16], index: 2, kind: input, shape index: {}]
  %s3 = inlined_call_operand.hbm [shape: f32[64,64], index: 3, kind: input, shape index: {}]
  %s4 = inlined_call_operand.vmem [shape: f32[4,1,16], index: 4, kind: input, shape index: {}]
  %s5 = inlined_call_operand.hbm [shape: f32[64,64], index: 5, kind: input, shape index: {}]
  %s6 = inlined_call_operand.vmem [shape: f32[4,1,16], index: 6, kind: input, shape index: {}]
  %s7 = inlined_call_operand.hbm [shape: f32[64,64], index: 7, kind: input, shape index: {}]
  %s8 = inlined_call_operand.vmem [shape: f32[1,64], index: 8, kind: input, shape index: {}]
  %s9 = inlined_call_operand.vmem [shape: f32[1,64], index: 9, kind: input, shape index: {}]
  %s10 = inlined_call_operand.vmem [shape: f32[1,64], index: 10, kind: input, shape index: {}]
  %s11 = inlined_call_operand.hbm [shape: f32[32,64], index: 11, kind: output, shape index: {}]
  %s12 = sld [smem:[#allocation0]]
  $region105: #{tpu_custom_call.1} parent=0
    _
  %s14 = ssub.s32 1, %s12
  %s15 = scalar_select 0, %s14, %s12
  $region1: #{tpu_custom_call.1} parent=0
    #allocation3 [shape = 'u8[16384]{0}', space=vmem, size = 0x4000, scoped, tag = 'input window, operand 0']
    #allocation4 [shape = 's32[2]{0}', space=sflag, size = 0x8, scoped, tag = 'scoped memory for tpu_custom_call.1']
    #allocation5 [shape = 's32[2]{0}', space=sflag, size = 0x8, scoped, tag = 'scoped memory for tpu_custom_call.1']
    #allocation6 [shape = 'u8[16384]{0}', space=vmem, size = 0x4000, scoped, tag = 'input window, operand 1']
    #allocation7 [shape = 's32[2]{0}', space=sflag, size = 0x8, scoped, tag = 'scoped memory for tpu_custom_call.1']
    #allocation8 [shape = 'u8[16384]{0}', space=vmem, size = 0x4000, scoped, tag = 'input window, operand 3']
    #allocation9 [shape = 'u8[16384]{0}', space=vmem, size = 0x4000, scoped, tag = 'input window, operand 5']
    #allocation10 [shape = 's32[2]{0}', space=sflag, size = 0x8, scoped, tag = 'scoped memory for tpu_custom_call.1']
    #allocation11 [shape = 'u8[16384]{0}', space=vmem, size = 0x4000, scoped, tag = 'input window, operand 7']
    #allocation12 [shape = 'u8[16384]{0}', space=vmem, size = 0x4000, scoped, tag = 'output window, operand 0']
    %16 = vsyncpa [#allocation4], 0
    %s17 = scalar_lea.sflag [#allocation4], 1
    %18 = vsyncpa %s17, 0
    %19 = vsyncpa [#allocation7], 0
    %s20 = scalar_lea.sflag [#allocation7], 1
    %21 = vsyncpa %s20, 0
    %22 = vsyncpa [#allocation10], 0
    %s23 = scalar_lea.sflag [#allocation10], 1
    %24 = vsyncpa %s23, 0
    %25 = vsyncpa [#allocation5], 0
    %s26 = scalar_lea.sflag [#allocation5], 1
    %27 = vsyncpa %s26, 0
    loop: start=0, step=1, limit=10
    $region2: #{tpu_custom_call.1} parent=1 // loop_pre_header
      _
    $region3: #{tpu_custom_call.1} parent=1 // loop_header
      %s29 = sphi 0, %s33
      %p30 = scmp.ge.s32.totalorder %s29, 10
      %s36 = sphi 0, %s48
      %s37 = sphi 0, %s44
      %s38 = sphi 0, %s36
      %s39 = sphi 0, %s37
      %s40 = sphi 0, %s38
      %s41 = sphi 0, %s39
      %s51 = sphi 0, %s53
      %s54 = sphi 0, %s51
      %s55 = sphi 0, %s54
      %s71 = sphi 0, %s55
      %s77 = sphi 0, %s79
      %s80 = sphi 0, %s77
      %s81 = sphi 0, %s80
      %s97 = sphi 0, %s81
      %s103 = sphi 0, %s105
      %s106 = sphi 0, %s103
      %s107 = sphi 0, %s106
      %s123 = sphi 0, %s107
      %s129 = sphi 0, %s131
      %s132 = sphi 0, %s129
      %s133 = sphi 0, %s132
      %s149 = sphi 0, %s133
      %s155 = sphi 0, %s157
      %s158 = sphi 0, %s155
      %s159 = sphi 0, %s158
      %s175 = sphi 0, %s159
      %s181 = sphi 0, %s183
      %s184 = sphi 0, %s181
      %s185 = sphi 0, %s184
      %s201 = sphi 0, %s185
      %s207 = sphi 0, %s209
      %s210 = sphi 0, %s207
      %s211 = sphi 0, %s210
      %s227 = sphi 0, %s211
      %s233 = sphi 0, %s235
      %s236 = sphi 0, %s233
      %s237 = sphi 0, %s236
      %s253 = sphi 0, %s237
      %s257 = sphi 0, %s257
      %s259 = sphi 0, %s257
      %s260 = sphi 0, %s259
      %s274 = sphi 0, %s260
      %s278 = sphi 0, %s278
      %s280 = sphi 0, %s278
      %s281 = sphi 0, %s280
      %s295 = sphi 0, %s281
      %s299 = sphi 0, %s299
      %s301 = sphi 0, %s299
      %s302 = sphi 0, %s301
      %s316 = sphi 0, %s302
      %s322 = sphi 0, %s324
      %s325 = sphi 0, %s322
      %s326 = sphi 0, %s325
      %s342 = sphi 0, %s326
    $region4: #{tpu_custom_call.1} parent=1 // loop_header_branch
      %32 = sbr.rel (%p30) target = $region8
    $region5: #{tpu_custom_call.1} parent=1 // loop_body
      %s34 = ssub.s32 %s29, 1
      %s35 = ssub.s32 %s29, 2
      %s42 = sadd.s32 1, %s37
      %p43 = scmp.ge.s32.totalorder %s42, 4
      %s44 = scalar_select %p43, 0, %s42
      %s45 = sadd.s32 1, %s36
      %s46 = scalar_select %p43, %s45, %s36
      %p47 = scmp.ge.s32.totalorder %s46, 2
      %s48 = scalar_select %p47, 0, %s46
      %s49 = ssub.s32 %s36, %s48
      %p50 = scmp.eq.s32.totalorder %s49, 0
      %s52 = sadd.s32 %s51, 1
      %s53 = scalar_select %p50, %s51, %s52
      %p56 = pneg %p50
      %p57 = scmp.eq.s32.totalorder %s29, 7
      %p58 = por %p56, %p57
      %p59 = scmp.ne.s32.totalorder %s51, %s54
      %p60 = scmp.eq.s32.totalorder %s29, 0
      %p61 = por %p59, %p60
      %p62 = scmp.ne.s32.totalorder %s51, %s54
      %p63 = scmp.eq.s32.totalorder %s34, 7
      %p64 = por %p62, %p63
      %p65 = scmp.ne.s32.totalorder %s54, %s55
      %p66 = scmp.eq.s32.totalorder %s34, 0
      %p67 = por %p65, %p66
      %p68 = scmp.ne.s32.totalorder %s54, %s55
      %p69 = scmp.eq.s32.totalorder %s35, 7
      %p70 = por %p68, %p69
      %p72 = scmp.ne.s32.totalorder %s55, %s71
      %p73 = scmp.eq.s32.totalorder %s35, 0
      %p74 = por %p72, %p73
      %s75 = ssub.s32 %s37, %s44
      %p76 = scmp.eq.s32.totalorder %s75, 0
      %s78 = sadd.s32 %s77, 1
      %s79 = scalar_select %p76, %s77, %s78
      %p82 = pneg %p76
      %p83 = scmp.eq.s32.totalorder %s29, 7
      %p84 = por %p82, %p83
      %p85 = scmp.ne.s32.totalorder %s77, %s80
      %p86 = scmp.eq.s32.totalorder %s29, 0
      %p87 = por %p85, %p86
      %p88 = scmp.ne.s32.totalorder %s77, %s80
      %p89 = scmp.eq.s32.totalorder %s34, 7
      %p90 = por %p88, %p89
      %p91 = scmp.ne.s32.totalorder %s80, %s81
      %p92 = scmp.eq.s32.totalorder %s34, 0
      %p93 = por %p91, %p92
      %p94 = scmp.ne.s32.totalorder %s80, %s81
      %p95 = scmp.eq.s32.totalorder %s35, 7
      %p96 = por %p94, %p95
      %p98 = scmp.ne.s32.totalorder %s81, %s97
      %p99 = scmp.eq.s32.totalorder %s35, 0
      %p100 = por %p98, %p99
      %s101 = ssub.s32 %s37, %s44
      %p102 = scmp.eq.s32.totalorder %s101, 0
      %s104 = sadd.s32 %s103, 1
      %s105 = scalar_select %p102, %s103, %s104
      %p108 = pneg %p102
      %p109 = scmp.eq.s32.totalorder %s29, 7
      %p110 = por %p108, %p109
      %p111 = scmp.ne.s32.totalorder %s103, %s106
      %p112 = scmp.eq.s32.totalorder %s29, 0
      %p113 = por %p111, %p112
      %p114 = scmp.ne.s32.totalorder %s103, %s106
      %p115 = scmp.eq.s32.totalorder %s34, 7
      %p116 = por %p114, %p115
      %p117 = scmp.ne.s32.totalorder %s106, %s107
      %p118 = scmp.eq.s32.totalorder %s34, 0
      %p119 = por %p117, %p118
      %p120 = scmp.ne.s32.totalorder %s106, %s107
      %p121 = scmp.eq.s32.totalorder %s35, 7
      %p122 = por %p120, %p121
      %p124 = scmp.ne.s32.totalorder %s107, %s123
      %p125 = scmp.eq.s32.totalorder %s35, 0
      %p126 = por %p124, %p125
      %s127 = ssub.s32 %s37, %s44
      %p128 = scmp.eq.s32.totalorder %s127, 0
      %s130 = sadd.s32 %s129, 1
      %s131 = scalar_select %p128, %s129, %s130
      %p134 = pneg %p128
      %p135 = scmp.eq.s32.totalorder %s29, 7
      %p136 = por %p134, %p135
      %p137 = scmp.ne.s32.totalorder %s129, %s132
      %p138 = scmp.eq.s32.totalorder %s29, 0
      %p139 = por %p137, %p138
      %p140 = scmp.ne.s32.totalorder %s129, %s132
      %p141 = scmp.eq.s32.totalorder %s34, 7
      %p142 = por %p140, %p141
      %p143 = scmp.ne.s32.totalorder %s132, %s133
      %p144 = scmp.eq.s32.totalorder %s34, 0
      %p145 = por %p143, %p144
      %p146 = scmp.ne.s32.totalorder %s132, %s133
      %p147 = scmp.eq.s32.totalorder %s35, 7
      %p148 = por %p146, %p147
      %p150 = scmp.ne.s32.totalorder %s133, %s149
      %p151 = scmp.eq.s32.totalorder %s35, 0
      %p152 = por %p150, %p151
      %s153 = ssub.s32 %s37, %s44
      %p154 = scmp.eq.s32.totalorder %s153, 0
      %s156 = sadd.s32 %s155, 1
      %s157 = scalar_select %p154, %s155, %s156
      %p160 = pneg %p154
      %p161 = scmp.eq.s32.totalorder %s29, 7
      %p162 = por %p160, %p161
      %p163 = scmp.ne.s32.totalorder %s155, %s158
      %p164 = scmp.eq.s32.totalorder %s29, 0
      %p165 = por %p163, %p164
      %p166 = scmp.ne.s32.totalorder %s155, %s158
      %p167 = scmp.eq.s32.totalorder %s34, 7
      %p168 = por %p166, %p167
      %p169 = scmp.ne.s32.totalorder %s158, %s159
      %p170 = scmp.eq.s32.totalorder %s34, 0
      %p171 = por %p169, %p170
      %p172 = scmp.ne.s32.totalorder %s158, %s159
      %p173 = scmp.eq.s32.totalorder %s35, 7
      %p174 = por %p172, %p173
      %p176 = scmp.ne.s32.totalorder %s159, %s175
      %p177 = scmp.eq.s32.totalorder %s35, 0
      %p178 = por %p176, %p177
      %s179 = ssub.s32 %s37, %s44
      %p180 = scmp.eq.s32.totalorder %s179, 0
      %s182 = sadd.s32 %s181, 1
      %s183 = scalar_select %p180, %s181, %s182
      %p186 = pneg %p180
      %p187 = scmp.eq.s32.totalorder %s29, 7
      %p188 = por %p186, %p187
      %p189 = scmp.ne.s32.totalorder %s181, %s184
      %p190 = scmp.eq.s32.totalorder %s29, 0
      %p191 = por %p189, %p190
      %p192 = scmp.ne.s32.totalorder %s181, %s184
      %p193 = scmp.eq.s32.totalorder %s34, 7
      %p194 = por %p192, %p193
      %p195 = scmp.ne.s32.totalorder %s184, %s185
      %p196 = scmp.eq.s32.totalorder %s34, 0
      %p197 = por %p195, %p196
      %p198 = scmp.ne.s32.totalorder %s184, %s185
      %p199 = scmp.eq.s32.totalorder %s35, 7
      %p200 = por %p198, %p199
      %p202 = scmp.ne.s32.totalorder %s185, %s201
      %p203 = scmp.eq.s32.totalorder %s35, 0
      %p204 = por %p202, %p203
      %s205 = ssub.s32 %s37, %s44
      %p206 = scmp.eq.s32.totalorder %s205, 0
      %s208 = sadd.s32 %s207, 1
      %s209 = scalar_select %p206, %s207, %s208
      %p212 = pneg %p206
      %p213 = scmp.eq.s32.totalorder %s29, 7
      %p214 = por %p212, %p213
      %p215 = scmp.ne.s32.totalorder %s207, %s210
      %p216 = scmp.eq.s32.totalorder %s29, 0
      %p217 = por %p215, %p216
      %p218 = scmp.ne.s32.totalorder %s207, %s210
      %p219 = scmp.eq.s32.totalorder %s34, 7
      %p220 = por %p218, %p219
      %p221 = scmp.ne.s32.totalorder %s210, %s211
      %p222 = scmp.eq.s32.totalorder %s34, 0
      %p223 = por %p221, %p222
      %p224 = scmp.ne.s32.totalorder %s210, %s211
      %p225 = scmp.eq.s32.totalorder %s35, 7
      %p226 = por %p224, %p225
      %p228 = scmp.ne.s32.totalorder %s211, %s227
      %p229 = scmp.eq.s32.totalorder %s35, 0
      %p230 = por %p228, %p229
      %s231 = ssub.s32 %s37, %s44
      %p232 = scmp.eq.s32.totalorder %s231, 0
      %s234 = sadd.s32 %s233, 1
      %s235 = scalar_select %p232, %s233, %s234
      %p238 = pneg %p232
      %p239 = scmp.eq.s32.totalorder %s29, 7
      %p240 = por %p238, %p239
      %p241 = scmp.ne.s32.totalorder %s233, %s236
      %p242 = scmp.eq.s32.totalorder %s29, 0
      %p243 = por %p241, %p242
      %p244 = scmp.ne.s32.totalorder %s233, %s236
      %p245 = scmp.eq.s32.totalorder %s34, 7
      %p246 = por %p244, %p245
      %p247 = scmp.ne.s32.totalorder %s236, %s237
      %p248 = scmp.eq.s32.totalorder %s34, 0
      %p249 = por %p247, %p248
      %p250 = scmp.ne.s32.totalorder %s236, %s237
      %p251 = scmp.eq.s32.totalorder %s35, 7
      %p252 = por %p250, %p251
      %p254 = scmp.ne.s32.totalorder %s237, %s253
      %p255 = scmp.eq.s32.totalorder %s35, 0
      %p256 = por %p254, %p255
      %s258 = sadd.s32 %s257, 1
      %p261 = scmp.eq.s32.totalorder %s29, 7
      %p262 = scmp.ne.s32.totalorder %s257, %s259
      %p263 = scmp.eq.s32.totalorder %s29, 0
      %p264 = por %p262, %p263
      %p265 = scmp.ne.s32.totalorder %s257, %s259
      %p266 = scmp.eq.s32.totalorder %s34, 7
      %p267 = por %p265, %p266
      %p268 = scmp.ne.s32.totalorder %s259, %s260
      %p269 = scmp.eq.s32.totalorder %s34, 0
      %p270 = por %p268, %p269
      %p271 = scmp.ne.s32.totalorder %s259, %s260
      %p272 = scmp.eq.s32.totalorder %s35, 7
      %p273 = por %p271, %p272
      %p275 = scmp.ne.s32.totalorder %s260, %s274
      %p276 = scmp.eq.s32.totalorder %s35, 0
      %p277 = por %p275, %p276
      %s279 = sadd.s32 %s278, 1
      %p282 = scmp.eq.s32.totalorder %s29, 7
      %p283 = scmp.ne.s32.totalorder %s278, %s280
      %p284 = scmp.eq.s32.totalorder %s29, 0
      %p285 = por %p283, %p284
      %p286 = scmp.ne.s32.totalorder %s278, %s280
      %p287 = scmp.eq.s32.totalorder %s34, 7
      %p288 = por %p286, %p287
      %p289 = scmp.ne.s32.totalorder %s280, %s281
      %p290 = scmp.eq.s32.totalorder %s34, 0
      %p291 = por %p289, %p290
      %p292 = scmp.ne.s32.totalorder %s280, %s281
      %p293 = scmp.eq.s32.totalorder %s35, 7
      %p294 = por %p292, %p293
      %p296 = scmp.ne.s32.totalorder %s281, %s295
      %p297 = scmp.eq.s32.totalorder %s35, 0
      %p298 = por %p296, %p297
      %s300 = sadd.s32 %s299, 1
      %p303 = scmp.eq.s32.totalorder %s29, 7
      %p304 = scmp.ne.s32.totalorder %s299, %s301
      %p305 = scmp.eq.s32.totalorder %s29, 0
      %p306 = por %p304, %p305
      %p307 = scmp.ne.s32.totalorder %s299, %s301
      %p308 = scmp.eq.s32.totalorder %s34, 7
      %p309 = por %p307, %p308
      %p310 = scmp.ne.s32.totalorder %s301, %s302
      %p311 = scmp.eq.s32.totalorder %s34, 0
      %p312 = por %p310, %p311
      %p313 = scmp.ne.s32.totalorder %s301, %s302
      %p314 = scmp.eq.s32.totalorder %s35, 7
      %p315 = por %p313, %p314
      %p317 = scmp.ne.s32.totalorder %s302, %s316
      %p318 = scmp.eq.s32.totalorder %s35, 0
      %p319 = por %p317, %p318
      %s320 = ssub.s32 %s36, %s48
      %p321 = scmp.eq.s32.totalorder %s320, 0
      %s323 = sadd.s32 %s322, 1
      %s324 = scalar_select %p321, %s322, %s323
      %p327 = pneg %p321
      %p328 = scmp.eq.s32.totalorder %s29, 7
      %p329 = por %p327, %p328
      %p330 = scmp.ne.s32.totalorder %s322, %s325
      %p331 = scmp.eq.s32.totalorder %s29, 0
      %p332 = por %p330, %p331
      %p333 = scmp.ne.s32.totalorder %s322, %s325
      %p334 = scmp.eq.s32.totalorder %s34, 7
      %p335 = por %p333, %p334
      %p336 = scmp.ne.s32.totalorder %s325, %s326
      %p337 = scmp.eq.s32.totalorder %s34, 0
      %p338 = por %p336, %p337
      %p339 = scmp.ne.s32.totalorder %s325, %s326
      %p340 = scmp.eq.s32.totalorder %s35, 7
      %p341 = por %p339, %p340
      %p343 = scmp.ne.s32.totalorder %s326, %s342
      %p344 = scmp.eq.s32.totalorder %s35, 0
      %p345 = por %p343, %p344
      %p346 = scmp.le.s32.totalorder 1, %s29
      %p347 = scmp.lt.s32.totalorder %s29, 9
      %p348 = pnand %p346, %p347
      %p349 = pneg %p348
      // Predicated region
      $region9: #{tpu_custom_call.1} parent=5 // pred_check
        _
      $region10: #{tpu_custom_call.1} parent=5 // pred_check_branch
        %351 = sbr.rel (%p348) target = $region12
      $region11: #{tpu_custom_call.1} parent=5 // pred_region
        %s352 = ssub.s32 %s29, 1
        // Predicated region
        $region13: #{tpu_custom_call.1} parent=11 // pred_check
          %p353 = pneg %p270
        $region14: #{tpu_custom_call.1} parent=11 // pred_check_branch
          %355 = sbr.rel (%p353) target = $region16
        $region15: #{tpu_custom_call.1} parent=11 // pred_region
          _
        $region16: #{tpu_custom_call.1} parent=11 // pred_fallthru
          _
        // Predicated region
        $region17: #{tpu_custom_call.1} parent=11 // pred_check
          %p356 = pneg %p291
        $region18: #{tpu_custom_call.1} parent=11 // pred_check_branch
          %358 = sbr.rel (%p356) target = $region20
        $region19: #{tpu_custom_call.1} parent=11 // pred_region
          _
        $region20: #{tpu_custom_call.1} parent=11 // pred_fallthru
          _
        // Predicated region
        $region21: #{tpu_custom_call.1} parent=11 // pred_check
          %p359 = pneg %p312
        $region22: #{tpu_custom_call.1} parent=11 // pred_check_branch
          %361 = sbr.rel (%p359) target = $region24
        $region23: #{tpu_custom_call.1} parent=11 // pred_region
          _
        $region24: #{tpu_custom_call.1} parent=11 // pred_fallthru
          _
      $region12: #{tpu_custom_call.1} parent=5 // pred_fallthru
        _
      %p362 = scmp.lt.s32.totalorder %s29, 8
      // Predicated region
      $region25: #{tpu_custom_call.1} parent=5 // pred_check
        %p363 = pneg %p362
      $region26: #{tpu_custom_call.1} parent=5 // pred_check_branch
        %365 = sbr.rel (%p363) target = $region28
      $region27: #{tpu_custom_call.1} parent=5 // pred_region
        // Predicated region
        $region29: #{tpu_custom_call.1} parent=27 // pred_check
          %p366 = pneg %p61
        $region30: #{tpu_custom_call.1} parent=27 // pred_check_branch
          %368 = sbr.rel (%p366) target = $region32
        $region31: #{tpu_custom_call.1} parent=27 // pred_region
          %s369 = sand.u32 %s51, 1
          %s370 = scalar_lea.sflag [#allocation4], %s369
          %s371 = sand.u32 %s51, 1
          %s372 = smul.addr %s371, 16
          %s373 = scalar_lea.vmem [#allocation3], %s372
          %s374 = smul.u32 2, %s36
          %s376 = ssub.s32 256, 256
          %377 = vsyncadd %s370, %s376
          %s378 = smul.addr %s374, 128
          %s379 = scalar_lea.hbm %s0, %s378
          %s380 = sshll.u32 %s373, 4
          %s381 = int_to_ptr.vmem [resolvable:$true] %s380
          %386 = dma.hbm_to_vmem [thread:$0]  %s379, 256, %s381, %s370, 128, 128, 8
        $region32: #{tpu_custom_call.1} parent=27 // pred_fallthru
          _
        // Predicated region
        $region33: #{tpu_custom_call.1} parent=27 // pred_check
          %p387 = pneg %p87
        $region34: #{tpu_custom_call.1} parent=27 // pred_check_branch
          %389 = sbr.rel (%p387) target = $region36
        $region35: #{tpu_custom_call.1} parent=27 // pred_region
          %s390 = sand.u32 %s29, 1
          %s391 = scalar_lea.sflag [#allocation7], %s390
          %s392 = sand.u32 %s77, 1
          %s393 = smul.addr %s392, 16
          %s394 = scalar_lea.vmem [#allocation6], %s393
          %s395 = smul.u32 2, %s37
          %s397 = ssub.s32 256, 256
          %398 = vsyncadd %s391, %s397
          %s399 = smul.addr %s395, 128
          %s400 = scalar_lea.hbm %s1, %s399
          %s401 = sshll.u32 %s394, 4
          %s402 = int_to_ptr.vmem [resolvable:$true] %s401
          %407 = dma.hbm_to_vmem [thread:$0]  %s400, 256, %s402, %s391, 128, 128, 8
        $region36: #{tpu_custom_call.1} parent=27 // pred_fallthru
          _
        // Predicated region
        $region37: #{tpu_custom_call.1} parent=27 // pred_check
          %p408 = pneg %p113
        $region38: #{tpu_custom_call.1} parent=27 // pred_check_branch
          %410 = sbr.rel (%p408) target = $region40
        $region39: #{tpu_custom_call.1} parent=27 // pred_region
          %p411 = scmp.lt.s32.totalorder %s37, 3
          %s412 = scalar_select %p411, %s37, 3
          %s413 = scalar_lea.vmem %s2, %s412
        $region40: #{tpu_custom_call.1} parent=27 // pred_fallthru
          _
        // Predicated region
        $region41: #{tpu_custom_call.1} parent=27 // pred_check
          %p414 = pneg %p139
        $region42: #{tpu_custom_call.1} parent=27 // pred_check_branch
          %416 = sbr.rel (%p414) target = $region44
        $region43: #{tpu_custom_call.1} parent=27 // pred_region
          %s417 = sand.u32 %s29, 1
          %s418 = scalar_lea.sflag [#allocation7], %s417
          %s419 = sand.u32 %s129, 1
          %s420 = smul.addr %s419, 16
          %s421 = scalar_lea.vmem [#allocation8], %s420
          %s422 = smul.u32 2, %s37
          %s424 = ssub.s32 256, 256
          %425 = vsyncadd %s418, %s424
          %s426 = smul.addr %s422, 128
          %s427 = scalar_lea.hbm %s3, %s426
          %s428 = sshll.u32 %s421, 4
          %s429 = int_to_ptr.vmem [resolvable:$true] %s428
          %434 = dma.hbm_to_vmem [thread:$0]  %s427, 256, %s429, %s418, 128, 128, 8
        $region44: #{tpu_custom_call.1} parent=27 // pred_fallthru
          _
        // Predicated region
        $region45: #{tpu_custom_call.1} parent=27 // pred_check
          %p435 = pneg %p165
        $region46: #{tpu_custom_call.1} parent=27 // pred_check_branch
          %437 = sbr.rel (%p435) target = $region48
        $region47: #{tpu_custom_call.1} parent=27 // pred_region
          %p438 = scmp.lt.s32.totalorder %s37, 3
          %s439 = scalar_select %p438, %s37, 3
          %s440 = scalar_lea.vmem %s4, %s439
        $region48: #{tpu_custom_call.1} parent=27 // pred_fallthru
          _
        // Predicated region
        $region49: #{tpu_custom_call.1} parent=27 // pred_check
          %p441 = pneg %p191
        $region50: #{tpu_custom_call.1} parent=27 // pred_check_branch
          %443 = sbr.rel (%p441) target = $region52
        $region51: #{tpu_custom_call.1} parent=27 // pred_region
          %s444 = sand.u32 %s29, 1
          %s445 = scalar_lea.sflag [#allocation10], %s444
          %s446 = sand.u32 %s181, 1
          %s447 = smul.addr %s446, 16
          %s448 = scalar_lea.vmem [#allocation9], %s447
          %s449 = smul.u32 2, %s37
          %s451 = ssub.s32 256, 256
          %452 = vsyncadd %s445, %s451
          %s453 = smul.addr %s449, 128
          %s454 = scalar_lea.hbm %s5, %s453
          %s455 = sshll.u32 %s448, 4
          %s456 = int_to_ptr.vmem [resolvable:$true] %s455
          %461 = dma.hbm_to_vmem [thread:$0]  %s454, 256, %s456, %s445, 128, 128, 8
        $region52: #{tpu_custom_call.1} parent=27 // pred_fallthru
          _
        // Predicated region
        $region53: #{tpu_custom_call.1} parent=27 // pred_check
          %p462 = pneg %p217
        $region54: #{tpu_custom_call.1} parent=27 // pred_check_branch
          %464 = sbr.rel (%p462) target = $region56
        $region55: #{tpu_custom_call.1} parent=27 // pred_region
          %p465 = scmp.lt.s32.totalorder %s37, 3
          %s466 = scalar_select %p465, %s37, 3
          %s467 = scalar_lea.vmem %s6, %s466
        $region56: #{tpu_custom_call.1} parent=27 // pred_fallthru
          _
        // Predicated region
        $region57: #{tpu_custom_call.1} parent=27 // pred_check
          %p468 = pneg %p243
        $region58: #{tpu_custom_call.1} parent=27 // pred_check_branch
          %470 = sbr.rel (%p468) target = $region60
        $region59: #{tpu_custom_call.1} parent=27 // pred_region
          %s471 = sand.u32 %s29, 1
          %s472 = scalar_lea.sflag [#allocation10], %s471
          %s473 = sand.u32 %s233, 1
          %s474 = smul.addr %s473, 16
          %s475 = scalar_lea.vmem [#allocation11], %s474
          %s476 = smul.u32 2, %s37
          %s478 = ssub.s32 256, 256
          %479 = vsyncadd %s472, %s478
          %s480 = smul.addr %s476, 128
          %s481 = scalar_lea.hbm %s7, %s480
          %s482 = sshll.u32 %s475, 4
          %s483 = int_to_ptr.vmem [resolvable:$true] %s482
          %488 = dma.hbm_to_vmem [thread:$0]  %s481, 256, %s483, %s472, 128, 128, 8
        $region60: #{tpu_custom_call.1} parent=27 // pred_fallthru
          _
      $region28: #{tpu_custom_call.1} parent=5 // pred_fallthru
        _
      %p489 = scmp.le.s32.totalorder 1, %s29
      %p490 = scmp.lt.s32.totalorder %s29, 9
      %p491 = pnand %p489, %p490
      %p492 = pneg %p491
      // Predicated region
      $region61: #{tpu_custom_call.1} parent=5 // pred_check
        _
      $region62: #{tpu_custom_call.1} parent=5 // pred_check_branch
        %494 = sbr.rel (%p491) target = $region64
      $region63: #{tpu_custom_call.1} parent=5 // pred_region
        %s495 = ssub.s32 %s29, 1
        %s496 = sand.u32 %s54, 1
        %s497 = scalar_lea.sflag [#allocation4], %s496
        %s498 = sand.u32 %s54, 1
        %s499 = smul.addr %s498, 16
        %s500 = scalar_lea.vmem [#allocation3], %s499
        // Predicated region
        $region65: #{tpu_custom_call.1} parent=63 // pred_check
          %p501 = pneg %p67
        $region66: #{tpu_custom_call.1} parent=63 // pred_check_branch
          %503 = sbr.rel (%p501) target = $region68
        $region67: #{tpu_custom_call.1} parent=63 // pred_region
          %504 = dma.done %s497, 256
        $region68: #{tpu_custom_call.1} parent=63 // pred_fallthru
          _
        %s505 = sand.u32 %s34, 1
        %s506 = scalar_lea.sflag [#allocation7], %s505
        %s507 = sand.u32 %s80, 1
        %s508 = smul.addr %s507, 16
        %s509 = scalar_lea.vmem [#allocation6], %s508
        // Predicated region
        $region69: #{tpu_custom_call.1} parent=63 // pred_check
          %p510 = pneg %p93
        $region70: #{tpu_custom_call.1} parent=63 // pred_check_branch
          %512 = sbr.rel (%p510) target = $region72
        $region71: #{tpu_custom_call.1} parent=63 // pred_region
          %513 = dma.done %s506, 256
        $region72: #{tpu_custom_call.1} parent=63 // pred_fallthru
          _
        %s514 = sand.u32 %s34, 1
        %s515 = scalar_lea.sflag [#allocation7], %s514
        %s516 = sand.u32 %s132, 1
        %s517 = smul.addr %s516, 16
        %s518 = scalar_lea.vmem [#allocation8], %s517
        // Predicated region
        $region73: #{tpu_custom_call.1} parent=63 // pred_check
          %p519 = pneg %p145
        $region74: #{tpu_custom_call.1} parent=63 // pred_check_branch
          %521 = sbr.rel (%p519) target = $region76
        $region75: #{tpu_custom_call.1} parent=63 // pred_region
          %522 = dma.done %s515, 256
        $region76: #{tpu_custom_call.1} parent=63 // pred_fallthru
          _
        %s523 = sand.u32 %s34, 1
        %s524 = scalar_lea.sflag [#allocation10], %s523
        %s525 = sand.u32 %s184, 1
        %s526 = smul.addr %s525, 16
        %s527 = scalar_lea.vmem [#allocation9], %s526
        // Predicated region
        $region77: #{tpu_custom_call.1} parent=63 // pred_check
          %p528 = pneg %p197
        $region78: #{tpu_custom_call.1} parent=63 // pred_check_branch
          %530 = sbr.rel (%p528) target = $region80
        $region79: #{tpu_custom_call.1} parent=63 // pred_region
          %531 = dma.done %s524, 256
        $region80: #{tpu_custom_call.1} parent=63 // pred_fallthru
          _
        %s532 = sand.u32 %s34, 1
        %s533 = scalar_lea.sflag [#allocation10], %s532
        %s534 = sand.u32 %s236, 1
        %s535 = smul.addr %s534, 16
        %s536 = scalar_lea.vmem [#allocation11], %s535
        // Predicated region
        $region81: #{tpu_custom_call.1} parent=63 // pred_check
          %p537 = pneg %p249
        $region82: #{tpu_custom_call.1} parent=63 // pred_check_branch
          %539 = sbr.rel (%p537) target = $region84
        $region83: #{tpu_custom_call.1} parent=63 // pred_region
          %540 = dma.done %s533, 256
        $region84: #{tpu_custom_call.1} parent=63 // pred_fallthru
          _
        %s541 = sand.u32 %s54, 1
        %s542 = scalar_lea.sflag [#allocation4], %s541
        %s543 = sand.u32 %s54, 1
        %s544 = smul.addr %s543, 16
        %s545 = scalar_lea.vmem [#allocation3], %s544
        %p546 = pneg %p67
        %p547 = pneg %p64
        %s548 = sand.u32 %s34, 1
        %s549 = scalar_lea.sflag [#allocation7], %s548
        %s550 = sand.u32 %s80, 1
        %s551 = smul.addr %s550, 16
        %s552 = scalar_lea.vmem [#allocation6], %s551
        %p553 = pneg %p93
        %p554 = pneg %p90
        %p555 = scmp.lt.s32.totalorder %s39, 3
        %s556 = scalar_select %p555, %s39, 3
        %s557 = scalar_lea.vmem %s2, %s556
        %p558 = pneg %p119
        %p559 = pneg %p116
        %s560 = sand.u32 %s34, 1
        %s561 = scalar_lea.sflag [#allocation7], %s560
        %s562 = sand.u32 %s132, 1
        %s563 = smul.addr %s562, 16
        %s564 = scalar_lea.vmem [#allocation8], %s563
        %p565 = pneg %p145
        %p566 = pneg %p142
        %p567 = scmp.lt.s32.totalorder %s39, 3
        %s568 = scalar_select %p567, %s39, 3
        %s569 = scalar_lea.vmem %s4, %s568
        %p570 = pneg %p171
        %p571 = pneg %p168
        %s572 = sand.u32 %s34, 1
        %s573 = scalar_lea.sflag [#allocation10], %s572
        %s574 = sand.u32 %s184, 1
        %s575 = smul.addr %s574, 16
        %s576 = scalar_lea.vmem [#allocation9], %s575
        %p577 = pneg %p197
        %p578 = pneg %p194
        %p579 = scmp.lt.s32.totalorder %s39, 3
        %s580 = scalar_select %p579, %s39, 3
        %s581 = scalar_lea.vmem %s6, %s580
        %p582 = pneg %p223
        %p583 = pneg %p220
        %s584 = sand.u32 %s34, 1
        %s585 = scalar_lea.sflag [#allocation10], %s584
        %s586 = sand.u32 %s236, 1
        %s587 = smul.addr %s586, 16
        %s588 = scalar_lea.vmem [#allocation11], %s587
        %p589 = pneg %p249
        %p590 = pneg %p246
        %p591 = pneg %p270
        %p592 = pneg %p267
        %p593 = pneg %p291
        %p594 = pneg %p288
        %p595 = pneg %p312
        %p596 = pneg %p309
        %p597 = pneg %p338
        %p598 = pneg %p335
        %s599 = sand.u32 %s325, 1
        %s600 = scalar_lea.sflag [#allocation5], %s599
        %s601 = sand.u32 %s325, 1
        %s602 = smul.addr %s601, 16
        %s603 = scalar_lea.vmem [#allocation12], %s602
        %s604 = smul.u32 2, %s38
        %s605 = smul.u32 2, %s39
        %p606 = scmp.lt.s32.totalorder %s39, 3
        %s607 = scalar_select %p606, %s39, 3
        %s608 = scalar_lea.vmem %s2, %s607
        %s609 = smul.u32 2, %s39
        %p610 = scmp.lt.s32.totalorder %s39, 3
        %s611 = scalar_select %p610, %s39, 3
        %s612 = scalar_lea.vmem %s4, %s611
        %s613 = smul.u32 2, %s39
        %p614 = scmp.lt.s32.totalorder %s39, 3
        %s615 = scalar_select %p614, %s39, 3
        %s616 = scalar_lea.vmem %s6, %s615
        %s617 = smul.u32 2, %s39
        %s618 = smul.u32 2, %s38
        %p619 = scmp.eq.s32.totalorder %s39, 0
        // Predicated region
        $region85: #{tpu_custom_call.1} parent=63 // pred_check
          %p620 = pneg %p619
        $region86: #{tpu_custom_call.1} parent=63 // pred_check_branch
          %622 = sbr.rel (%p620) target = $region88
        $region87: #{tpu_custom_call.1} parent=63 // pred_region
          %vm623 = vcmask 523264
          %624 = vst.msk [vmem:[#allocation2] sm:$0xff] %vm623, 0.0
          %625 = vst.msk [vmem:[#allocation2 + $0x8] sm:$0xff] %vm623, 0.0
        $region88: #{tpu_custom_call.1} parent=63 // pred_fallthru
          _
        %v626 = vld [vmem:[%s500] sm:$0xff]
        %v627 = vld [vmem:[%s500 + $0x8] sm:$0xff]
        %v628 = vld [vmem:[%s518] sm:$0xff]
        %v629 = vld [vmem:[%s518 + $0x8] sm:$0xff]
        %v630 = vld [vmem:[%s612] sm:$0x1]
        %v632 = vlaneseq
        %v633 = vshrl.u32 %v632, 7
        %v634 = vsub.s32 0, %v633
        %v635 = vrot.slane %v630, %v634
        %vm637 = vcmask 523264
        %v639 = vsel %vm637, %v626, 0
        %v642 = vsel %vm637, %v627, 0
        %v645 = vsel %vm637, %v628, 0
        %v648 = vsel %vm637, %v629, 0
        %650 = vmatprep.subr.mxu0 0.0
        %651 = vmatpush1.xpose.msra.mxu0 %v645
        %652 = vmatprep.subr.mxu0 0.0
        %653 = vmatpush1.xpose.msra.mxu0 %v648
        %654 = vmatprep.subr.mxu0 0.0
        %655 = vmatpush1.xpose.msra.mxu0 0.0
        %656 = vmatprep.subr.mxu0 0.0
        %657 = vmatpush1.xpose.msra.mxu0 0.0
        %658 = vmatprep.subr.mxu0 0.0
        %659 = vmatpush1.xpose.msra.mxu0 0.0
        %660 = vmatprep.subr.mxu0 0.0
        %661 = vmatpush1.xpose.msra.mxu0 0.0
        %662 = vmatprep.subr.mxu0 0.0
        %663 = vmatpush1.xpose.msra.mxu0 0.0
        %664 = vmatprep.subr.mxu0 0.0
        %665 = vmatpush1.xpose.msra.mxu0 0.0
        %666 = vmatprep.subr.mxu0 0.0
        %667 = vmatpush1.xpose.msra.mxu0 0.0
        %668 = vmatprep.subr.mxu0 0.0
        %669 = vmatpush1.xpose.msra.mxu0 0.0
        %670 = vmatprep.subr.mxu0 0.0
        %671 = vmatpush1.xpose.msra.mxu0 0.0
        %672 = vmatprep.subr.mxu0 0.0
        %673 = vmatpush1.xpose.msra.mxu0 0.0
        %674 = vmatprep.subr.mxu0 0.0
        %675 = vmatpush1.xpose.msra.mxu0 0.0
        %676 = vmatprep.subr.mxu0 0.0
        %677 = vmatpush1.xpose.msra.mxu0 0.0
        %678 = vmatprep.subr.mxu0 0.0
        %679 = vmatpush1.xpose.msra.mxu0 0.0
        %680 = vmatprep.subr.mxu0 0.0
        %681 = vmatpush1.xpose.msra.mxu0 0.0
        %682 = vmatprep.subr.mxu0 0.0
        %683 = vmatpush1.xpose.msra.mxu0 0.0
        %684 = vmatprep.subr.mxu0 0.0
        %685 = vmatpush1.xpose.msra.mxu0 0.0
        %686 = vmatprep.subr.mxu0 0.0
        %687 = vmatpush1.xpose.msra.mxu0 0.0
        %688 = vmatprep.subr.mxu0 0.0
        %689 = vmatpush1.xpose.msra.mxu0 0.0
        %690 = vmatprep.subr.mxu0 0.0
        %691 = vmatpush1.xpose.msra.mxu0 0.0
        %692 = vmatprep.subr.mxu0 0.0
        %693 = vmatpush1.xpose.msra.mxu0 0.0
        %694 = vmatprep.subr.mxu0 0.0
        %695 = vmatpush1.xpose.msra.mxu0 0.0
        %696 = vmatprep.subr.mxu0 0.0
        %697 = vmatpush1.xpose.msra.mxu0 0.0
        %698 = vmatprep.subr.mxu0 0.0
        %699 = vmatpush1.xpose.msra.mxu0 0.0
        %700 = vmatprep.subr.mxu0 0.0
        %701 = vmatpush1.xpose.msra.mxu0 0.0
        %702 = vmatprep.subr.mxu0 0.0
        %703 = vmatpush1.xpose.msra.mxu0 0.0
        %704 = vmatprep.subr.mxu0 0.0
        %705 = vmatpush1.xpose.msra.mxu0 0.0
        %706 = vmatprep.subr.mxu0 0.0
        %707 = vmatpush1.xpose.msra.mxu0 0.0
        %708 = vmatprep.subr.mxu0 0.0
        %709 = vmatpush1.xpose.msra.mxu0 0.0
        %710 = vmatprep.subr.mxu0 0.0
        %711 = vmatpush1.xpose.msra.mxu0 0.0
        %712 = vmatprep.subr.mxu0 0.0
        %713 = vmatpush1.xpose.msra.mxu0 0.0
        %714 = vmatprep.mubr.f32.mxu0 0.0
        %715 = vmatmul.mubr.f32.gmra.mrb[0].mxu0 %v639
        %v716 = vpop.f32.mrb[0].mxu0
        %v717 = vadd.f32 %v635, %v716
        %v718 = vpop.f32.mrb[0].mxu0
        %719 = vmatprep.mubr.f32.mxu0 0.0
        %720 = vmatmul.mubr.f32.gmra.mrb[0].mxu0 %v642
        %v721 = vpop.f32.mrb[0].mxu0
        %v722 = vadd.f32 %v635, %v721
        %v723 = vpop.f32.mrb[0].mxu0
        %724 = vdwg.mxu0
        %v725 = vld [vmem:[%s527] sm:$0xff]
        %v726 = vld [vmem:[%s527 + $0x8] sm:$0xff]
        %v727 = vld [vmem:[%s616] sm:$0x1]
        %v729 = vlaneseq
        %v730 = vshrl.u32 %v729, 7
        %v731 = vsub.s32 0, %v730
        %v732 = vrot.slane %v727, %v731
        %v735 = vsel %vm637, %v725, 0
        %v738 = vsel %vm637, %v726, 0
        %740 = vmatprep.subr.mxu0 0.0
        %741 = vmatpush1.xpose.msra.mxu0 %v735
        %742 = vmatprep.subr.mxu0 0.0
        %743 = vmatpush1.xpose.msra.mxu0 %v738
        %744 = vmatprep.subr.mxu0 0.0
        %745 = vmatpush1.xpose.msra.mxu0 0.0
        %746 = vmatprep.subr.mxu0 0.0
        %747 = vmatpush1.xpose.msra.mxu0 0.0
        %748 = vmatprep.subr.mxu0 0.0
        %749 = vmatpush1.xpose.msra.mxu0 0.0
        %750 = vmatprep.subr.mxu0 0.0
        %751 = vmatpush1.xpose.msra.mxu0 0.0
        %752 = vmatprep.subr.mxu0 0.0
        %753 = vmatpush1.xpose.msra.mxu0 0.0
        %754 = vmatprep.subr.mxu0 0.0
        %755 = vmatpush1.xpose.msra.mxu0 0.0
        %756 = vmatprep.subr.mxu0 0.0
        %757 = vmatpush1.xpose.msra.mxu0 0.0
        %758 = vmatprep.subr.mxu0 0.0
        %759 = vmatpush1.xpose.msra.mxu0 0.0
        %760 = vmatprep.subr.mxu0 0.0
        %761 = vmatpush1.xpose.msra.mxu0 0.0
        %762 = vmatprep.subr.mxu0 0.0
        %763 = vmatpush1.xpose.msra.mxu0 0.0
        %764 = vmatprep.subr.mxu0 0.0
        %765 = vmatpush1.xpose.msra.mxu0 0.0
        %766 = vmatprep.subr.mxu0 0.0
        %767 = vmatpush1.xpose.msra.mxu0 0.0
        %768 = vmatprep.subr.mxu0 0.0
        %769 = vmatpush1.xpose.msra.mxu0 0.0
        %770 = vmatprep.subr.mxu0 0.0
        %771 = vmatpush1.xpose.msra.mxu0 0.0
        %772 = vmatprep.subr.mxu0 0.0
        %773 = vmatpush1.xpose.msra.mxu0 0.0
        %774 = vmatprep.subr.mxu0 0.0
        %775 = vmatpush1.xpose.msra.mxu0 0.0
        %776 = vmatprep.subr.mxu0 0.0
        %777 = vmatpush1.xpose.msra.mxu0 0.0
        %778 = vmatprep.subr.mxu0 0.0
        %779 = vmatpush1.xpose.msra.mxu0 0.0
        %780 = vmatprep.subr.mxu0 0.0
        %781 = vmatpush1.xpose.msra.mxu0 0.0
        %782 = vmatprep.subr.mxu0 0.0
        %783 = vmatpush1.xpose.msra.mxu0 0.0
        %784 = vmatprep.subr.mxu0 0.0
        %785 = vmatpush1.xpose.msra.mxu0 0.0
        %786 = vmatprep.subr.mxu0 0.0
        %787 = vmatpush1.xpose.msra.mxu0 0.0
        %788 = vmatprep.subr.mxu0 0.0
        %789 = vmatpush1.xpose.msra.mxu0 0.0
        %790 = vmatprep.subr.mxu0 0.0
        %791 = vmatpush1.xpose.msra.mxu0 0.0
        %792 = vmatprep.subr.mxu0 0.0
        %793 = vmatpush1.xpose.msra.mxu0 0.0
        %794 = vmatprep.subr.mxu0 0.0
        %795 = vmatpush1.xpose.msra.mxu0 0.0
        %796 = vmatprep.subr.mxu0 0.0
        %797 = vmatpush1.xpose.msra.mxu0 0.0
        %798 = vmatprep.subr.mxu0 0.0
        %799 = vmatpush1.xpose.msra.mxu0 0.0
        %800 = vmatprep.subr.mxu0 0.0
        %801 = vmatpush1.xpose.msra.mxu0 0.0
        %802 = vmatprep.subr.mxu0 0.0
        %803 = vmatpush1.xpose.msra.mxu0 0.0
        %804 = vmatprep.mubr.f32.mxu0 0.0
        %805 = vmatmul.mubr.f32.gmra.mrb[0].mxu0 %v639
        %v806 = vpop.f32.mrb[0].mxu0
        %v807 = vadd.f32 %v732, %v806
        %v808 = vpop.f32.mrb[0].mxu0
        %809 = vmatprep.mubr.f32.mxu0 0.0
        %810 = vmatmul.mubr.f32.gmra.mrb[0].mxu0 %v642
        %v811 = vpop.f32.mrb[0].mxu0
        %v812 = vadd.f32 %v732, %v811
        %v813 = vpop.f32.mrb[0].mxu0
        %814 = vdwg.mxu0
        %v815 = vld [vmem:[%s500] sm:$0xff]
        %v816 = vld [vmem:[%s500 + $0x8] sm:$0xff]
        %v817 = vld [vmem:[%s509] sm:$0xff]
        %v818 = vld [vmem:[%s509 + $0x8] sm:$0xff]
        %v819 = vld [vmem:[%s608] sm:$0x1]
        %v821 = vlaneseq
        %v822 = vshrl.u32 %v821, 7
        %v823 = vsub.s32 0, %v822
        %v824 = vrot.slane %v819, %v823
        %v827 = vsel %vm637, %v815, 0
        %v830 = vsel %vm637, %v816, 0
        %v833 = vsel %vm637, %v817, 0
        %v836 = vsel %vm637, %v818, 0
        %838 = vmatprep.subr.mxu0 0.0
        %839 = vmatpush1.xpose.msra.mxu0 %v833
        %840 = vmatprep.subr.mxu0 0.0
        %841 = vmatpush1.xpose.msra.mxu0 %v836
        %842 = vmatprep.subr.mxu0 0.0
        %843 = vmatpush1.xpose.msra.mxu0 0.0
        %844 = vmatprep.subr.mxu0 0.0
        %845 = vmatpush1.xpose.msra.mxu0 0.0
        %846 = vmatprep.subr.mxu0 0.0
        %847 = vmatpush1.xpose.msra.mxu0 0.0
        %848 = vmatprep.subr.mxu0 0.0
        %849 = vmatpush1.xpose.msra.mxu0 0.0
        %850 = vmatprep.subr.mxu0 0.0
        %851 = vmatpush1.xpose.msra.mxu0 0.0
        %852 = vmatprep.subr.mxu0 0.0
        %853 = vmatpush1.xpose.msra.mxu0 0.0
        %854 = vmatprep.subr.mxu0 0.0
        %855 = vmatpush1.xpose.msra.mxu0 0.0
        %856 = vmatprep.subr.mxu0 0.0
        %857 = vmatpush1.xpose.msra.mxu0 0.0
        %858 = vmatprep.subr.mxu0 0.0
        %859 = vmatpush1.xpose.msra.mxu0 0.0
        %860 = vmatprep.subr.mxu0 0.0
        %861 = vmatpush1.xpose.msra.mxu0 0.0
        %862 = vmatprep.subr.mxu0 0.0
        %863 = vmatpush1.xpose.msra.mxu0 0.0
        %864 = vmatprep.subr.mxu0 0.0
        %865 = vmatpush1.xpose.msra.mxu0 0.0
        %866 = vmatprep.subr.mxu0 0.0
        %867 = vmatpush1.xpose.msra.mxu0 0.0
        %868 = vmatprep.subr.mxu0 0.0
        %869 = vmatpush1.xpose.msra.mxu0 0.0
        %870 = vmatprep.subr.mxu0 0.0
        %871 = vmatpush1.xpose.msra.mxu0 0.0
        %872 = vmatprep.subr.mxu0 0.0
        %873 = vmatpush1.xpose.msra.mxu0 0.0
        %874 = vmatprep.subr.mxu0 0.0
        %875 = vmatpush1.xpose.msra.mxu0 0.0
        %876 = vmatprep.subr.mxu0 0.0
        %877 = vmatpush1.xpose.msra.mxu0 0.0
        %878 = vmatprep.subr.mxu0 0.0
        %879 = vmatpush1.xpose.msra.mxu0 0.0
        %880 = vmatprep.subr.mxu0 0.0
        %881 = vmatpush1.xpose.msra.mxu0 0.0
        %882 = vmatprep.subr.mxu0 0.0
        %883 = vmatpush1.xpose.msra.mxu0 0.0
        %884 = vmatprep.subr.mxu0 0.0
        %885 = vmatpush1.xpose.msra.mxu0 0.0
        %886 = vmatprep.subr.mxu0 0.0
        %887 = vmatpush1.xpose.msra.mxu0 0.0
        %888 = vmatprep.subr.mxu0 0.0
        %889 = vmatpush1.xpose.msra.mxu0 0.0
        %890 = vmatprep.subr.mxu0 0.0
        %891 = vmatpush1.xpose.msra.mxu0 0.0
        %892 = vmatprep.subr.mxu0 0.0
        %893 = vmatpush1.xpose.msra.mxu0 0.0
        %894 = vmatprep.subr.mxu0 0.0
        %895 = vmatpush1.xpose.msra.mxu0 0.0
        %896 = vmatprep.subr.mxu0 0.0
        %897 = vmatpush1.xpose.msra.mxu0 0.0
        %898 = vmatprep.subr.mxu0 0.0
        %899 = vmatpush1.xpose.msra.mxu0 0.0
        %900 = vmatprep.subr.mxu0 0.0
        %901 = vmatpush1.xpose.msra.mxu0 0.0
        %902 = vmatprep.mubr.f32.mxu0 0.0
        %903 = vmatmul.mubr.f32.gmra.mrb[0].mxu0 %v827
        %v904 = vpop.f32.mrb[0].mxu0
        %v905 = vadd.f32 %v824, %v904
        %v906 = vpop.f32.mrb[0].mxu0
        %907 = vmatprep.mubr.f32.mxu0 0.0
        %908 = vmatmul.mubr.f32.gmra.mrb[0].mxu0 %v830
        %v909 = vpop.f32.mrb[0].mxu0
        %v910 = vadd.f32 %v824, %v909
        %v911 = vpop.f32.mrb[0].mxu0
        %912 = vdwg.mxu0
        %v913 = vmul.f32 %v905, 0.25
        %v914 = vmul.f32 %v910, 0.25
        %vm915 = vcmask 130048
        %v917 = vsel %vm915, %v913, 0
        %v920 = vsel %vm915, %v914, 0
        %v923 = vsel %vm915, %v717, 0
        %v926 = vsel %vm915, %v722, 0
        %928 = vmatprep.subr.mxu0 0.0
        %929 = vmatpush1.xpose.msra.mxu0 %v923
        %930 = vmatprep.subr.mxu0 0.0
        %931 = vmatpush1.xpose.msra.mxu0 %v926
        %932 = vmatprep.subr.mxu0 0.0
        %933 = vmatpush1.xpose.msra.mxu0 0.0
        %934 = vmatprep.subr.mxu0 0.0
        %935 = vmatpush1.xpose.msra.mxu0 0.0
        %936 = vmatprep.subr.mxu0 0.0
        %937 = vmatpush1.xpose.msra.mxu0 0.0
        %938 = vmatprep.subr.mxu0 0.0
        %939 = vmatpush1.xpose.msra.mxu0 0.0
        %940 = vmatprep.subr.mxu0 0.0
        %941 = vmatpush1.xpose.msra.mxu0 0.0
        %942 = vmatprep.subr.mxu0 0.0
        %943 = vmatpush1.xpose.msra.mxu0 0.0
        %944 = vmatprep.subr.mxu0 0.0
        %945 = vmatpush1.xpose.msra.mxu0 0.0
        %946 = vmatprep.subr.mxu0 0.0
        %947 = vmatpush1.xpose.msra.mxu0 0.0
        %948 = vmatprep.subr.mxu0 0.0
        %949 = vmatpush1.xpose.msra.mxu0 0.0
        %950 = vmatprep.subr.mxu0 0.0
        %951 = vmatpush1.xpose.msra.mxu0 0.0
        %952 = vmatprep.subr.mxu0 0.0
        %953 = vmatpush1.xpose.msra.mxu0 0.0
        %954 = vmatprep.subr.mxu0 0.0
        %955 = vmatpush1.xpose.msra.mxu0 0.0
        %956 = vmatprep.subr.mxu0 0.0
        %957 = vmatpush1.xpose.msra.mxu0 0.0
        %958 = vmatprep.subr.mxu0 0.0
        %959 = vmatpush1.xpose.msra.mxu0 0.0
        %960 = vmatprep.subr.mxu0 0.0
        %961 = vmatpush1.xpose.msra.mxu0 0.0
        %962 = vmatprep.subr.mxu0 0.0
        %963 = vmatpush1.xpose.msra.mxu0 0.0
        %964 = vmatprep.subr.mxu0 0.0
        %965 = vmatpush1.xpose.msra.mxu0 0.0
        %966 = vmatprep.subr.mxu0 0.0
        %967 = vmatpush1.xpose.msra.mxu0 0.0
        %968 = vmatprep.subr.mxu0 0.0
        %969 = vmatpush1.xpose.msra.mxu0 0.0
        %970 = vmatprep.subr.mxu0 0.0
        %971 = vmatpush1.xpose.msra.mxu0 0.0
        %972 = vmatprep.subr.mxu0 0.0
        %973 = vmatpush1.xpose.msra.mxu0 0.0
        %974 = vmatprep.subr.mxu0 0.0
        %975 = vmatpush1.xpose.msra.mxu0 0.0
        %976 = vmatprep.subr.mxu0 0.0
        %977 = vmatpush1.xpose.msra.mxu0 0.0
        %978 = vmatprep.subr.mxu0 0.0
        %979 = vmatpush1.xpose.msra.mxu0 0.0
        %980 = vmatprep.subr.mxu0 0.0
        %981 = vmatpush1.xpose.msra.mxu0 0.0
        %982 = vmatprep.subr.mxu0 0.0
        %983 = vmatpush1.xpose.msra.mxu0 0.0
        %984 = vmatprep.subr.mxu0 0.0
        %985 = vmatpush1.xpose.msra.mxu0 0.0
        %986 = vmatprep.subr.mxu0 0.0
        %987 = vmatpush1.xpose.msra.mxu0 0.0
        %988 = vmatprep.subr.mxu0 0.0
        %989 = vmatpush1.xpose.msra.mxu0 0.0
        %990 = vmatprep.subr.mxu0 0.0
        %991 = vmatpush1.xpose.msra.mxu0 0.0
        %992 = vmatprep.mubr.f32.mxu0 0.0
        %993 = vmatmul.mubr.f32.gmra.mrb[0].mxu0 %v917
        %v994 = vpop.f32.mrb[0].mxu0
        %v995 = vadd.f32 0.0, %v994
        %v996 = vpop.f32.mrb[0].mxu0
        %997 = vmatprep.mubr.f32.mxu0 0.0
        %998 = vmatmul.mubr.f32.gmra.mrb[0].mxu0 %v920
        %v999 = vpop.f32.mrb[0].mxu0
        %v1000 = vadd.f32 0.0, %v999
        %v1001 = vpop.f32.mrb[0].mxu0
        %1002 = vdwg.mxu0
        %v1003 = vsel %vm915, %v995, -inf
        %1004 = vmax.xlane.f32.xlu0 %v1003
        %v1005 = vpop.xlane.xlu0 %1004
        %v1006 = vsel %vm915, %v1000, -inf
        %1007 = vmax.xlane.f32.xlu0 %v1006
        %v1008 = vpop.xlane.xlu0 %1007
        %v1009 = vsub.f32 %v995, %v1005
        %v1010 = vsub.f32 %v1000, %v1008
        %v1011 = vmul.f32 %v1009, 1.442695
        %v1012 = vpow.pop %v1011
        %v1013 = vmul.f32 %v1010, 1.442695
        %v1014 = vpow.pop %v1013
        %v1015 = vsel %vm915, %v1012, 0.0
        %1016 = vadd.xlane.f32.xlu0 %v1015
        %v1017 = vpop.xlane.xlu0 %1016
        %v1018 = vsel %vm915, %v1014, 0.0
        %1019 = vadd.xlane.f32.xlu0 %v1018
        %v1020 = vpop.xlane.xlu0 %1019
        %v1021 = vrcp.pop %v1017
        %v1022 = vrcp.pop %v1020
        %v1023 = vmul.f32 %v1012, %v1021
        %v1024 = vmul.f32 %v1014, %v1022
        %v1026 = vsel %vm915, %v1023, 0
        %v1029 = vsel %vm915, %v1024, 0
        %1031 = vmatprep.subr.mxu0 0.0
        %1032 = vmatpush1.msra.mxu0 %v807
        %1033 = vmatprep.subr.mxu0 0.0
        %1034 = vmatpush1.msra.mxu0 %v812
        %1035 = vmatprep.subr.mxu0 0.0
        %1036 = vmatpush1.msra.mxu0 0.0
        %1037 = vmatprep.subr.mxu0 0.0
        %1038 = vmatpush1.msra.mxu0 0.0
        %1039 = vmatprep.subr.mxu0 0.0
        %1040 = vmatpush1.msra.mxu0 0.0
        %1041 = vmatprep.subr.mxu0 0.0
        %1042 = vmatpush1.msra.mxu0 0.0
        %1043 = vmatprep.subr.mxu0 0.0
        %1044 = vmatpush1.msra.mxu0 0.0
        %1045 = vmatprep.subr.mxu0 0.0
        %1046 = vmatpush1.msra.mxu0 0.0
        %1047 = vmatprep.subr.mxu0 0.0
        %1048 = vmatpush1.msra.mxu0 0.0
        %1049 = vmatprep.subr.mxu0 0.0
        %1050 = vmatpush1.msra.mxu0 0.0
        %1051 = vmatprep.subr.mxu0 0.0
        %1052 = vmatpush1.msra.mxu0 0.0
        %1053 = vmatprep.subr.mxu0 0.0
        %1054 = vmatpush1.msra.mxu0 0.0
        %1055 = vmatprep.subr.mxu0 0.0
        %1056 = vmatpush1.msra.mxu0 0.0
        %1057 = vmatprep.subr.mxu0 0.0
        %1058 = vmatpush1.msra.mxu0 0.0
        %1059 = vmatprep.subr.mxu0 0.0
        %1060 = vmatpush1.msra.mxu0 0.0
        %1061 = vmatprep.subr.mxu0 0.0
        %1062 = vmatpush1.msra.mxu0 0.0
        %1063 = vmatprep.subr.mxu0 0.0
        %1064 = vmatpush1.msra.mxu0 0.0
        %1065 = vmatprep.subr.mxu0 0.0
        %1066 = vmatpush1.msra.mxu0 0.0
        %1067 = vmatprep.subr.mxu0 0.0
        %1068 = vmatpush1.msra.mxu0 0.0
        %1069 = vmatprep.subr.mxu0 0.0
        %1070 = vmatpush1.msra.mxu0 0.0
        %1071 = vmatprep.subr.mxu0 0.0
        %1072 = vmatpush1.msra.mxu0 0.0
        %1073 = vmatprep.subr.mxu0 0.0
        %1074 = vmatpush1.msra.mxu0 0.0
        %1075 = vmatprep.subr.mxu0 0.0
        %1076 = vmatpush1.msra.mxu0 0.0
        %1077 = vmatprep.subr.mxu0 0.0
        %1078 = vmatpush1.msra.mxu0 0.0
        %1079 = vmatprep.subr.mxu0 0.0
        %1080 = vmatpush1.msra.mxu0 0.0
        %1081 = vmatprep.subr.mxu0 0.0
        %1082 = vmatpush1.msra.mxu0 0.0
        %1083 = vmatprep.subr.mxu0 0.0
        %1084 = vmatpush1.msra.mxu0 0.0
        %1085 = vmatprep.subr.mxu0 0.0
        %1086 = vmatpush1.msra.mxu0 0.0
        %1087 = vmatprep.subr.mxu0 0.0
        %1088 = vmatpush1.msra.mxu0 0.0
        %1089 = vmatprep.subr.mxu0 0.0
        %1090 = vmatpush1.msra.mxu0 0.0
        %1091 = vmatprep.subr.mxu0 0.0
        %1092 = vmatpush1.msra.mxu0 0.0
        %1093 = vmatprep.subr.mxu0 0.0
        %1094 = vmatpush1.msra.mxu0 0.0
        %1095 = vmatprep.mubr.f32.mxu0 0.0
        %1096 = vmatmul.mubr.f32.gmra.mrb[0].mxu0 %v1026
        %v1097 = vpop.f32.mrb[0].mxu0
        %v1098 = vadd.f32 0.0, %v1097
        %v1099 = vpop.f32.mrb[0].mxu0
        %1100 = vmatprep.mubr.f32.mxu0 0.0
        %1101 = vmatmul.mubr.f32.gmra.mrb[0].mxu0 %v1029
        %v1102 = vpop.f32.mrb[0].mxu0
        %v1103 = vadd.f32 0.0, %v1102
        %v1104 = vpop.f32.mrb[0].mxu0
        %1105 = vdwg.mxu0
        %v1106 = vld [vmem:[%s536] sm:$0xff]
        %v1107 = vld [vmem:[%s536 + $0x8] sm:$0xff]
        %v1109 = vsel %vm915, %v1098, 0
        %v1112 = vsel %vm915, %v1103, 0
        %1114 = vmatprep.subr.mxu0 0.0
        %1115 = vmatpush1.msra.mxu0 %v1106
        %1116 = vmatprep.subr.mxu0 0.0
        %1117 = vmatpush1.msra.mxu0 %v1107
        %1118 = vmatprep.subr.mxu0 0.0
        %1119 = vmatpush1.msra.mxu0 0.0
        %1120 = vmatprep.subr.mxu0 0.0
        %1121 = vmatpush1.msra.mxu0 0.0
        %1122 = vmatprep.subr.mxu0 0.0
        %1123 = vmatpush1.msra.mxu0 0.0
        %1124 = vmatprep.subr.mxu0 0.0
        %1125 = vmatpush1.msra.mxu0 0.0
        %1126 = vmatprep.subr.mxu0 0.0
        %1127 = vmatpush1.msra.mxu0 0.0
        %1128 = vmatprep.subr.mxu0 0.0
        %1129 = vmatpush1.msra.mxu0 0.0
        %1130 = vmatprep.subr.mxu0 0.0
        %1131 = vmatpush1.msra.mxu0 0.0
        %1132 = vmatprep.subr.mxu0 0.0
        %1133 = vmatpush1.msra.mxu0 0.0
        %1134 = vmatprep.subr.mxu0 0.0
        %1135 = vmatpush1.msra.mxu0 0.0
        %1136 = vmatprep.subr.mxu0 0.0
        %1137 = vmatpush1.msra.mxu0 0.0
        %1138 = vmatprep.subr.mxu0 0.0
        %1139 = vmatpush1.msra.mxu0 0.0
        %1140 = vmatprep.subr.mxu0 0.0
        %1141 = vmatpush1.msra.mxu0 0.0
        %1142 = vmatprep.subr.mxu0 0.0
        %1143 = vmatpush1.msra.mxu0 0.0
        %1144 = vmatprep.subr.mxu0 0.0
        %1145 = vmatpush1.msra.mxu0 0.0
        %1146 = vmatprep.subr.mxu0 0.0
        %1147 = vmatpush1.msra.mxu0 0.0
        %1148 = vmatprep.subr.mxu0 0.0
        %1149 = vmatpush1.msra.mxu0 0.0
        %1150 = vmatprep.subr.mxu0 0.0
        %1151 = vmatpush1.msra.mxu0 0.0
        %1152 = vmatprep.subr.mxu0 0.0
        %1153 = vmatpush1.msra.mxu0 0.0
        %1154 = vmatprep.subr.mxu0 0.0
        %1155 = vmatpush1.msra.mxu0 0.0
        %1156 = vmatprep.subr.mxu0 0.0
        %1157 = vmatpush1.msra.mxu0 0.0
        %1158 = vmatprep.subr.mxu0 0.0
        %1159 = vmatpush1.msra.mxu0 0.0
        %1160 = vmatprep.subr.mxu0 0.0
        %1161 = vmatpush1.msra.mxu0 0.0
        %1162 = vmatprep.subr.mxu0 0.0
        %1163 = vmatpush1.msra.mxu0 0.0
        %1164 = vmatprep.subr.mxu0 0.0
        %1165 = vmatpush1.msra.mxu0 0.0
        %1166 = vmatprep.subr.mxu0 0.0
        %1167 = vmatpush1.msra.mxu0 0.0
        %1168 = vmatprep.subr.mxu0 0.0
        %1169 = vmatpush1.msra.mxu0 0.0
        %1170 = vmatprep.subr.mxu0 0.0
        %1171 = vmatpush1.msra.mxu0 0.0
        %1172 = vmatprep.subr.mxu0 0.0
        %1173 = vmatpush1.msra.mxu0 0.0
        %1174 = vmatprep.subr.mxu0 0.0
        %1175 = vmatpush1.msra.mxu0 0.0
        %1176 = vmatprep.subr.mxu0 0.0
        %1177 = vmatpush1.msra.mxu0 0.0
        %1178 = vmatprep.mubr.f32.mxu0 0.0
        %1179 = vmatmul.mubr.f32.gmra.mrb[0].mxu0 %v1109
        %v1180 = vpop.f32.mrb[0].mxu0
        %v1181 = vadd.f32 0.0, %v1180
        %v1182 = vpop.f32.mrb[0].mxu0
        %1183 = vmatprep.mubr.f32.mxu0 0.0
        %1184 = vmatmul.mubr.f32.gmra.mrb[0].mxu0 %v1112
        %v1185 = vpop.f32.mrb[0].mxu0
        %v1186 = vadd.f32 0.0, %v1185
        %v1187 = vpop.f32.mrb[0].mxu0
        %1188 = vdwg.mxu0
        %v1189 = vld [vmem:[#allocation2] sm:$0xff]
        %v1190 = vld [vmem:[#allocation2 + $0x8] sm:$0xff]
        %v1191 = vadd.f32 %v1189, %v1181
        %v1192 = vadd.f32 %v1190, %v1186
        %1193 = vst.msk [vmem:[#allocation2] sm:$0xff] %vm637, %v1191
        %1194 = vst.msk [vmem:[#allocation2 + $0x8] sm:$0xff] %vm637, %v1192
        %p1195 = scmp.eq.s32.totalorder %s39, 3
        // Predicated region
        $region89: #{tpu_custom_call.1} parent=63 // pred_check
          %p1196 = pneg %p1195
        $region90: #{tpu_custom_call.1} parent=63 // pred_check_branch
          %1198 = sbr.rel (%p1196) target = $region92
        $region91: #{tpu_custom_call.1} parent=63 // pred_region
          %v1199 = vld [vmem:[#allocation2] sm:$0xff]
          %v1200 = vld [vmem:[#allocation2 + $0x8] sm:$0xff]
          %v1201 = vld [vmem:[%s8] sm:$0x1]
          %v1203 = vlaneseq
          %v1204 = vshrl.u32 %v1203, 7
          %v1205 = vsub.s32 0, %v1204
          %v1206 = vrot.slane %v1201, %v1205
          %v1208 = vadd.f32 %v1199, %v1206
          %v1209 = vadd.f32 %v1200, %v1206
          %v1210 = vld [vmem:[%s500] sm:$0xff]
          %v1211 = vld [vmem:[%s500 + $0x8] sm:$0xff]
          %v1212 = vadd.f32 %v1208, %v1210
          %v1213 = vadd.f32 %v1209, %v1211
          %v1214 = vld [vmem:[%s9] sm:$0x1]
          %v1215 = vld [vmem:[%s10] sm:$0x1]
          %v1216 = vsel %vm637, %v1212, 0.0
          %1217 = vadd.xlane.f32.xlu0 %v1216
          %v1218 = vpop.xlane.xlu0 %1217
          %v1219 = vsel %vm637, %v1213, 0.0
          %1220 = vadd.xlane.f32.xlu0 %v1219
          %v1221 = vpop.xlane.xlu0 %1220
          %v1222 = vrcp.pop 64.0
          %v1223 = vmul.f32 %v1218, %v1222
          %v1224 = vmul.f32 %v1221, %v1222
          %v1225 = vsub.f32 %v1212, %v1223
          %v1226 = vsub.f32 %v1213, %v1224
          %v1227 = vmul.f32 %v1225, %v1225
          %v1228 = vmul.f32 %v1226, %v1226
          %v1229 = vsel %vm637, %v1227, 0.0
          %1230 = vadd.xlane.f32.xlu0 %v1229
          %v1231 = vpop.xlane.xlu0 %1230
          %v1232 = vsel %vm637, %v1228, 0.0
          %1233 = vadd.xlane.f32.xlu0 %v1232
          %v1234 = vpop.xlane.xlu0 %1233
          %v1235 = vmul.f32 %v1231, %v1222
          %v1236 = vmul.f32 %v1234, %v1222
          %v1237 = vadd.f32 %v1235, 1e-12
          %v1238 = vadd.f32 %v1236, 1e-12
          %v1239 = vrsqrt.pop %v1237
          %v1240 = vrsqrt.pop %v1238
          %v1241 = vmul.f32 %v1225, %v1239
          %v1242 = vmul.f32 %v1226, %v1240
          %v1244 = vlaneseq
          %v1245 = vshrl.u32 %v1244, 7
          %v1246 = vsub.s32 0, %v1245
          %v1247 = vrot.slane %v1214, %v1246
          %v1249 = vmul.f32 %v1241, %v1247
          %v1250 = vmul.f32 %v1242, %v1247
          %v1252 = vlaneseq
          %v1253 = vshrl.u32 %v1252, 7
          %v1254 = vsub.s32 0, %v1253
          %v1255 = vrot.slane %v1215, %v1254
          %v1257 = vadd.f32 %v1249, %v1255
          %v1258 = vadd.f32 %v1250, %v1255
          %1259 = vst.msk [vmem:[%s603] sm:$0xff] %vm637, %v1257
          %1260 = vst.msk [vmem:[%s603 + $0x8] sm:$0xff] %vm637, %v1258
        $region92: #{tpu_custom_call.1} parent=63 // pred_fallthru
          _
        %s1261 = sand.u32 %s325, 1
        %s1262 = scalar_lea.sflag [#allocation5], %s1261
        %s1263 = sand.u32 %s325, 1
        %s1264 = smul.addr %s1263, 16
        %s1265 = scalar_lea.vmem [#allocation12], %s1264
        // Predicated region
        $region93: #{tpu_custom_call.1} parent=63 // pred_check
          %p1266 = pneg %p335
        $region94: #{tpu_custom_call.1} parent=63 // pred_check_branch
          %1268 = sbr.rel (%p1266) target = $region96
        $region95: #{tpu_custom_call.1} parent=63 // pred_region
          %s1269 = smul.u32 2, %s38
          %s1271 = ssub.s32 256, 256
          %1272 = vsyncadd %s1262, %s1271
          %s1273 = smul.addr %s1269, 128
          %s1274 = scalar_lea.hbm %s11, %s1273
          %s1275 = sshll.u32 %s1265, 4
          %s1276 = int_to_ptr.vmem [resolvable:$true] %s1275
          %1281 = dma.vmem_to_hbm [thread:$0]  %s1276, 256, %s1274, %s1262, 128, 128, 8
        $region96: #{tpu_custom_call.1} parent=63 // pred_fallthru
          _
      $region64: #{tpu_custom_call.1} parent=5 // pred_fallthru
        _
      %p1282 = scmp.le.s32.totalorder 2, %s29
      // Predicated region
      $region97: #{tpu_custom_call.1} parent=5 // pred_check
        %p1283 = pneg %p1282
      $region98: #{tpu_custom_call.1} parent=5 // pred_check_branch
        %1285 = sbr.rel (%p1283) target = $region100
      $region99: #{tpu_custom_call.1} parent=5 // pred_region
        %s1286 = ssub.s32 %s29, 2
        // Predicated region
        $region101: #{tpu_custom_call.1} parent=99 // pred_check
          %p1287 = pneg %p341
        $region102: #{tpu_custom_call.1} parent=99 // pred_check_branch
          %1289 = sbr.rel (%p1287) target = $region104
        $region103: #{tpu_custom_call.1} parent=99 // pred_region
          %s1290 = sand.u32 %s326, 1
          %s1291 = scalar_lea.sflag [#allocation5], %s1290
          %s1292 = sand.u32 %s326, 1
          %s1293 = smul.addr %s1292, 16
          %s1294 = scalar_lea.vmem [#allocation12], %s1293
          %1295 = dma.done %s1291, 256
        $region104: #{tpu_custom_call.1} parent=99 // pred_fallthru
          _
      $region100: #{tpu_custom_call.1} parent=5 // pred_fallthru
        _
    $region6: #{tpu_custom_call.1} parent=1 // loop_footer
      %s33 = sadd.s32 1, %s29
    $region7: #{tpu_custom_call.1} parent=1 // loop_footer_branch
      %28 = sbr.rel target = $region3
    $region8: #{tpu_custom_call.1} parent=1 // loop_exit
      _
    %1296 = vsyncpa [#allocation4], 1
    %s1297 = scalar_lea.sflag [#allocation4], 1
    %1298 = vsyncpa %s1297, 1
    %1299 = vsyncpa [#allocation7], 1
    %s1300 = scalar_lea.sflag [#allocation7], 1
    %1301 = vsyncpa %s1300, 1
    %1302 = vsyncpa [#allocation10], 1
    %s1303 = scalar_lea.sflag [#allocation10], 1
    %1304 = vsyncpa %s1303, 1
    %1305 = vsyncpa [#allocation5], 1
    %s1306 = scalar_lea.sflag [#allocation5], 1
    %1307 = vsyncpa %s1306, 1

</llo_original>
